<compile_context>
chip_gen: v7x
topology: tpu7x:2x2x1
jax: 0.10.0
libtpu: 0.0.40
codegen_flags: <defaults>
</compile_context>

<pallas_src>
import functools
import math

import jax
import jax.numpy as jnp
from jax import lax
from jax.experimental import pallas as pl
from jax.experimental.pallas import tpu as pltpu


def _attention_ff_kernel(q_ref, kv_ref, bias_ref, xg_ref, wg_ref, gb_ref,
                         wo_ref, bo_ref, out_ref,
                         acc_ref, m_ref, l_ref, *, num_head, key_dim):
    # q_ref   : [tq, C]   bf16  pre-projected, pre-scaled queries
    # kv_ref  : [tk, 2C]  bf16  pre-projected keys | values
    # bias_ref: [1, tk]   f32   precomputed mask bias: 1e9 * (mask - 1)
    # xg_ref  : [tq, C]   bf16  raw input rows (for the gating projection)
    # wg_ref  : [C, C]    bf16 ; gb_ref [1, C]   f32
    # wo_ref  : [C, OUT]  bf16 ; bo_ref [1, OUT] f32
    # out_ref : [tq, OUT]
    # scratch : acc_ref [tq, C] f32, m_ref / l_ref [tq, H] f32
    ki = pl.program_id(2)
    nk = pl.num_programs(2)
    H, D = num_head, key_dim
    C = H * D
    tq = acc_ref.shape[0]

    @pl.when(ki == 0)
    def _init():
        acc_ref[...] = jnp.zeros_like(acc_ref)
        m_ref[...] = jnp.full(m_ref.shape, -1e30, dtype=m_ref.dtype)
        l_ref[...] = jnp.zeros_like(l_ref)

    q_all = q_ref[...]            # [tq, C]  bf16 (scaling already folded in)
    kv = kv_ref[...]              # [tk, 2C] bf16
    bias = bias_ref[...]          # [1, tk]  f32 (0 valid, -1e9 masked)
    m_all = m_ref[...]            # [tq, H]  f32
    l_all = l_ref[...]            # [tq, H]  f32

    pv_parts, alpha_parts, m_parts, l_parts = [], [], [], []
    # Heads unrolled (H is small); all slices stay on the 128-lane axis so no
    # [*, H, D] relayouts are needed.
    for h in range(H):
        q_h = q_all[:, h * D:(h + 1) * D]            # [tq, D]
        k_h = kv[:, h * D:(h + 1) * D]               # [tk, D]
        v_h = kv[:, C + h * D:C + (h + 1) * D]       # [tk, D]

        s = lax.dot_general(q_h, k_h, (((1,), (1,)), ((), ())),
                            preferred_element_type=jnp.float32)   # [tq, tk]
        s = s + bias

        m_prev = m_all[:, h:h + 1]                                 # [tq, 1]
        m_new = jnp.maximum(m_prev, jnp.max(s, axis=-1, keepdims=True))
        alpha = jnp.exp(m_prev - m_new)                            # f32 [tq,1]
        # bf16 exp: ~2x EUP throughput on v6e/v7x; stats stay f32.
        p = jnp.exp((s - m_new).astype(jnp.bfloat16))              # bf16 [tq,tk]

        l_new = alpha * l_all[:, h:h + 1] + jnp.sum(
            p, axis=-1, keepdims=True, dtype=jnp.float32)          # f32 [tq,1]
        pv = lax.dot_general(p, v_h, (((1,), (0,)), ((), ())),
                             preferred_element_type=jnp.float32)   # [tq, D]

        pv_parts.append(pv)
        alpha_parts.append(alpha)
        m_parts.append(m_new)
        l_parts.append(l_new)

    # Single lane-dense read-modify-write of the accumulator and one write
    # each for the [tq, H] softmax statistics.
    pv_all = jnp.concatenate(pv_parts, axis=-1)                    # [tq, C]
    alpha_full = jnp.concatenate(
        [jnp.broadcast_to(a, (tq, D)) for a in alpha_parts], axis=-1)
    acc_ref[...] = alpha_full * acc_ref[...] + pv_all
    m_ref[...] = jnp.concatenate(m_parts, axis=-1)
    l_ref[...] = jnp.concatenate(l_parts, axis=-1)

    @pl.when(ki == nk - 1)
    def _finalize():
        # Exact reciprocal (runs once per q-tile; negligible cost).
        inv_l = pl.reciprocal(l_ref[...])                          # [tq, H]
        inv_full = jnp.concatenate(
            [jnp.broadcast_to(inv_l[:, h:h + 1], (tq, D)) for h in range(H)],
            axis=-1)                                               # [tq, C]
        gate = jax.nn.sigmoid(
            jnp.dot(xg_ref[...], wg_ref[...],
                    preferred_element_type=jnp.float32) + gb_ref[...])
        wa = (acc_ref[...] * inv_full * gate).astype(jnp.bfloat16)  # [tq, C]
        out = jnp.dot(wa, wo_ref[...],
                      preferred_element_type=jnp.float32) + bo_ref[...]
        out_ref[...] = out.astype(out_ref.dtype)


def _pick_tile(n, candidates, what):
    for t in candidates:
        if t <= n and n % t == 0:
            return t
    if n <= 1024:
        # Full-extent tile (block == array dim) is legal and small enough for
        # every generation's scoped VMEM (incl. v7x 64 MiB physical).
        return n
    raise ValueError(
        f"{what}: no tile in {candidates} divides N={n}; pad the sequence to "
        f"a multiple of 128 (full-N tiles are only allowed for N<=1024 to "
        f"avoid the v7x VMEM cliff).")


def attention_ff(x, mask, wqkv_t, wg_t, gating_bias, wo_t, out_bias,
                 *, num_head, q_tile=None, kv_tile=None):
    B, N, C = x.shape
    OUT = wo_t.shape[1]
    key_dim = C // num_head
    scaling = 1.0 / math.sqrt(key_dim)

    tq = q_tile if q_tile is not None else _pick_tile(N, (512, 256, 128), "q_tile")
    tk = kv_tile if kv_tile is not None else _pick_tile(
        N, (1024, 512, 256, 128), "kv_tile")
    assert N % tq == 0 and (tq == N or tq % 8 == 0), (N, tq)
    assert N % tk == 0 and (tk == N or tk % 128 == 0), (N, tk)

    x_bf = x.astype(jnp.bfloat16)
    # Hoisted precompute (once per call, NOT once per q-tile inside the
    # kernel): softmax scaling folded into the Q weights, full Q / KV
    # projections (bf16 operands, f32 accumulation), additive mask bias.
    wq_bf = (wqkv_t[:, :C] * scaling).astype(jnp.bfloat16)
    wkv_bf = wqkv_t[:, C:].astype(jnp.bfloat16)
    q_proj = jnp.einsum('bnc,ck->bnk', x_bf, wq_bf,
                        preferred_element_type=jnp.float32).astype(jnp.bfloat16)
    kv_proj = jnp.einsum('bnc,ck->bnk', x_bf, wkv_bf,
                         preferred_element_type=jnp.float32).astype(jnp.bfloat16)
    bias = 1e9 * (mask.reshape(B, 1, N).astype(jnp.float32) - 1.0)
    wg_bf = wg_t.astype(jnp.bfloat16)
    wo_bf = wo_t.astype(jnp.bfloat16)
    gb2 = gating_bias.reshape(1, C).astype(jnp.float32)
    bo2 = out_bias.reshape(1, OUT).astype(jnp.float32)

    kernel = functools.partial(_attention_ff_kernel, num_head=num_head,
                               key_dim=key_dim)

    return pl.pallas_call(
        kernel,
        out_shape=jax.ShapeDtypeStruct((B, N, OUT), x.dtype),
        grid_spec=pltpu.PrefetchScalarGridSpec(
            num_scalar_prefetch=0,
            grid=(B, N // tq, N // tk),
            in_specs=[
                pl.BlockSpec((pl.Squeezed(), tq, C),
                             lambda b, qi, ki: (b, qi, 0)),          # Q (scaled)
                pl.BlockSpec((pl.Squeezed(), tk, 2 * C),
                             lambda b, qi, ki: (b, ki, 0)),          # K | V
                pl.BlockSpec((pl.Squeezed(), 1, tk),
                             lambda b, qi, ki: (b, 0, ki)),          # mask bias
                pl.BlockSpec((pl.Squeezed(), tq, C),
                             lambda b, qi, ki: (b, qi, 0)),          # x (gating)
                pl.BlockSpec((C, C), lambda b, qi, ki: (0, 0)),      # wg_t
                pl.BlockSpec((1, C), lambda b, qi, ki: (0, 0)),      # gating_bias
                pl.BlockSpec((C, OUT), lambda b, qi, ki: (0, 0)),    # wo_t
                pl.BlockSpec((1, OUT), lambda b, qi, ki: (0, 0)),    # out_bias
            ],
            out_specs=pl.BlockSpec((pl.Squeezed(), tq, OUT),
                                   lambda b, qi, ki: (b, qi, 0)),
            scratch_shapes=[
                pltpu.VMEM((tq, C), jnp.float32),            # P@V accumulator
                pltpu.VMEM((tq, num_head), jnp.float32),     # running max
                pltpu.VMEM((tq, num_head), jnp.float32),     # running sum
            ]),
        compiler_params=pltpu.CompilerParams(
            dimension_semantics=("parallel", "parallel", "arbitrary")),
    )(q_proj, kv_proj, bias, x_bf, wg_bf, gb2, wo_bf, bo2)


def attention_ff_reference(x, mask, wqkv_t, wg_t, gating_bias, wo_t, out_bias,
                           *, num_head):
    B, N, C = x.shape
    D = C // num_head
    scaling = 1.0 / math.sqrt(D)
    qkv = x @ wqkv_t                                     # [B, N, 3C]
    q, k, v = jnp.split(qkv, 3, axis=-1)
    q = q.reshape(B, N, num_head, D).transpose(0, 2, 1, 3)
    k = k.reshape(B, N, num_head, D).transpose(0, 2, 1, 3)
    v = v.reshape(B, N, num_head, D).transpose(0, 2, 1, 3)
    logits = jnp.einsum('bhqd,bhkd->bhqk', q, k) * scaling
    bias = 1e9 * (mask.reshape(B, 1, 1, N) - 1.0)
    weights = jax.nn.softmax(logits + bias, axis=-1)
    wa = jnp.einsum('bhqk,bhkd->bhqd', weights, v)
    wa = wa.transpose(0, 2, 1, 3).reshape(B, N, C)
    gate = jax.nn.sigmoid(x @ wg_t + gating_bias[None, None, :])
    wa = gate * wa
    return wa @ wo_t + out_bias[None, None, :]


def _run_case(key, B, N, C, H, OUT, q_tile=None, kv_tile=None):
    kx, kq, kg, ko, kb, km = jax.random.split(key, 6)
    x = jax.random.normal(kx, (B, N, C), dtype=jnp.float32)
    mask = (jax.random.uniform(km, (B, 1, N)) > 0.2).astype(jnp.float32)
    wqkv_t = 0.05 * jax.random.normal(kq, (C, 3 * C), dtype=jnp.float32)
    wg_t = 0.05 * jax.random.normal(kg, (C, C), dtype=jnp.float32)
    gating_bias = jnp.ones((C,), dtype=jnp.float32)
    wo_t = 0.05 * jax.random.normal(ko, (C, OUT), dtype=jnp.float32)
    out_bias = 0.05 * jax.random.normal(kb, (OUT,), dtype=jnp.float32)

    out = attention_ff(x, mask, wqkv_t, wg_t, gating_bias, wo_t, out_bias,
                       num_head=H, q_tile=q_tile, kv_tile=kv_tile)
    out = jax.block_until_ready(out)

    ref = attention_ff_reference(x, mask, wqkv_t, wg_t, gating_bias, wo_t,
                                 out_bias, num_head=H)
    assert out.shape == (B, N, OUT)
    # bf16 matmul operands / bf16 exp (f32 stats & accumulation) inside the
    # kernel vs a pure-f32 reference -> allow a few e-3 of absolute error.
    assert jnp.allclose(out, ref, rtol=2e-2, atol=2e-2), (
        float(jnp.max(jnp.abs(out - ref))))


if __name__ == "__main__":
    root = jax.random.PRNGKey(0)
    # Module-scale smoke test: B=2 seqs, N=16 residues, C=32, 4 heads.
    _run_case(jax.random.fold_in(root, 0), B=2, N=16, C=32, H=4, OUT=32)
    # Exercise the flash kv-streaming / q-tiling path (grid = (2, 2, 2)).
    _run_case(jax.random.fold_in(root, 1), B=2, N=256, C=32, H=4, OUT=32,
              q_tile=128, kv_tile=128)
    print("KERNEL_OK")
</pallas_src>

<mosaic_0001>
module attributes {stable_mosaic.version = 11 : i64} {
  func.func @_attention_ff_kernel(%arg0: i32, %arg1: i32, %arg2: i32, %arg3: memref<1x16x32xbf16, #tpu.memory_space<vmem>>, %arg4: memref<1x16x64xbf16, #tpu.memory_space<vmem>>, %arg5: memref<1x1x16xf32, #tpu.memory_space<vmem>>, %arg6: memref<1x16x32xbf16, #tpu.memory_space<vmem>>, %arg7: memref<32x32xbf16, #tpu.memory_space<vmem>>, %arg8: memref<1x32xf32, #tpu.memory_space<vmem>>, %arg9: memref<32x32xbf16, #tpu.memory_space<vmem>>, %arg10: memref<1x32xf32, #tpu.memory_space<vmem>>, %arg11: memref<1x16x32xf32, #tpu.memory_space<vmem>>, %arg12: memref<16x32xf32, #tpu.memory_space<vmem>>, %arg13: memref<16x4xf32, #tpu.memory_space<vmem>>, %arg14: memref<16x4xf32, #tpu.memory_space<vmem>>) attributes {dimension_semantics = [#tpu.dimension_semantics<parallel>, #tpu.dimension_semantics<parallel>, #tpu.dimension_semantics<arbitrary>], iteration_bounds = array<i64: 2, 1, 1>, scalar_prefetch = 0 : i64, scratch_operands = 3 : i64, tpu.core_type = #tpu.core_type<tc>, window_params = [{transform_indices = @transform_0, window_bounds = array<i64: 1, 16, 32>}, {transform_indices = @transform_1, window_bounds = array<i64: 1, 16, 64>}, {transform_indices = @transform_2, window_bounds = array<i64: 1, 1, 16>}, {transform_indices = @transform_3, window_bounds = array<i64: 1, 16, 32>}, {pipeline_mode = #tpu.pipeline_mode<synchronous>, transform_indices = @transform_4, window_bounds = array<i64: 32, 32>}, {pipeline_mode = #tpu.pipeline_mode<synchronous>, transform_indices = @transform_5, window_bounds = array<i64: 1, 32>}, {pipeline_mode = #tpu.pipeline_mode<synchronous>, transform_indices = @transform_6, window_bounds = array<i64: 32, 32>}, {pipeline_mode = #tpu.pipeline_mode<synchronous>, transform_indices = @transform_7, window_bounds = array<i64: 1, 32>}, {transform_indices = @transform_8, window_bounds = array<i64: 1, 16, 32>}]} {
    %c0_i32 = arith.constant 0 : i32
    %0 = arith.cmpi eq, %arg2, %c0_i32 : i32
    %1 = arith.extui %0 : i1 to i32
    %c0_i32_0 = arith.constant 0 : i32
    %2 = arith.cmpi ne, %1, %c0_i32_0 : i32
    scf.if %2 {
      %cst_38 = arith.constant 0.000000e+00 : f32
      %124 = vector.broadcast %cst_38 : f32 to vector<16x32xf32>
      %c0_39 = arith.constant 0 : index
      %c0_40 = arith.constant 0 : index
      %125 = vector.load %arg12[%c0_39, %c0_40] : memref<16x32xf32, #tpu.memory_space<vmem>>, vector<16x32xf32>
      tpu.vector_store %arg12[%c0_39, %c0_40], %124 {strides = array<i32>} : memref<16x32xf32, #tpu.memory_space<vmem>>, vector<16x32xf32>,
      %cst_41 = arith.constant -1.000000e+30 : f32
      %126 = vector.broadcast %cst_41 : f32 to vector<16x4xf32>
      %c0_42 = arith.constant 0 : index
      %c0_43 = arith.constant 0 : index
      %127 = vector.load %arg13[%c0_42, %c0_43] : memref<16x4xf32, #tpu.memory_space<vmem>>, vector<16x4xf32>
      tpu.vector_store %arg13[%c0_42, %c0_43], %126 {strides = array<i32>} : memref<16x4xf32, #tpu.memory_space<vmem>>, vector<16x4xf32>,
      %cst_44 = arith.constant 0.000000e+00 : f32
      %128 = vector.broadcast %cst_44 : f32 to vector<16x4xf32>
      %c0_45 = arith.constant 0 : index
      %c0_46 = arith.constant 0 : index
      %129 = vector.load %arg14[%c0_45, %c0_46] : memref<16x4xf32, #tpu.memory_space<vmem>>, vector<16x4xf32>
      tpu.vector_store %arg14[%c0_45, %c0_46], %128 {strides = array<i32>} : memref<16x4xf32, #tpu.memory_space<vmem>>, vector<16x4xf32>,
    } else {
    }
    %c0 = arith.constant 0 : index
    %c0_1 = arith.constant 0 : index
    %c0_2 = arith.constant 0 : index
    %3 = vector.load %arg3[%c0, %c0_1, %c0_2] : memref<1x16x32xbf16, #tpu.memory_space<vmem>>, vector<1x16x32xbf16>
    %4 = vector.shape_cast %3 : vector<1x16x32xbf16> to vector<16x32xbf16>
    %c0_3 = arith.constant 0 : index
    %c0_4 = arith.constant 0 : index
    %c0_5 = arith.constant 0 : index
    %5 = vector.load %arg4[%c0_3, %c0_4, %c0_5] : memref<1x16x64xbf16, #tpu.memory_space<vmem>>, vector<1x16x64xbf16>
    %6 = vector.shape_cast %5 : vector<1x16x64xbf16> to vector<16x64xbf16>
    %c0_6 = arith.constant 0 : index
    %c0_7 = arith.constant 0 : index
    %c0_8 = arith.constant 0 : index
    %7 = vector.load %arg5[%c0_6, %c0_7, %c0_8] : memref<1x1x16xf32, #tpu.memory_space<vmem>>, vector<1x1x16xf32>
    %8 = vector.shape_cast %7 : vector<1x1x16xf32> to vector<1x16xf32>
    %c0_9 = arith.constant 0 : index
    %c0_10 = arith.constant 0 : index
    %9 = vector.load %arg13[%c0_9, %c0_10] : memref<16x4xf32, #tpu.memory_space<vmem>>, vector<16x4xf32>
    %c0_11 = arith.constant 0 : index
    %c0_12 = arith.constant 0 : index
    %10 = vector.load %arg14[%c0_11, %c0_12] : memref<16x4xf32, #tpu.memory_space<vmem>>, vector<16x4xf32>
    %11 = vector.extract_strided_slice %4 {offsets = [0, 0], sizes = [16, 8], strides = [1, 1]} : vector<16x32xbf16> to vector<16x8xbf16>
    %12 = vector.extract_strided_slice %6 {offsets = [0, 0], sizes = [16, 8], strides = [1, 1]} : vector<16x64xbf16> to vector<16x8xbf16>
    %13 = vector.extract_strided_slice %6 {offsets = [0, 32], sizes = [16, 8], strides = [1, 1]} : vector<16x64xbf16> to vector<16x8xbf16>
    %cst = arith.constant dense<0.000000e+00> : vector<16x16xf32>
    %14 = tpu.matmul %11, %12, %cst {dimension_numbers = #tpu.dot_dimension_numbers<[1], [1], [0], [0], [0, 0, 1, 0], [], []>} : vector<16x8xbf16>, vector<16x8xbf16>, vector<16x16xf32> -> vector<16x16xf32>
    %15 = vector.broadcast %8 : vector<1x16xf32> to vector<16x16xf32>
    %16 = arith.addf %14, %15 : vector<16x16xf32>
    %17 = vector.extract_strided_slice %9 {offsets = [0, 0], sizes = [16, 1], strides = [1, 1]} : vector<16x4xf32> to vector<16x1xf32>
    %cst_13 = arith.constant dense<0xFF800000> : vector<16xf32>
    %18 = vector.multi_reduction <maximumf>, %16, %cst_13 [1] : vector<16x16xf32> to vector<16xf32>
    %19 = vector.shape_cast %18 : vector<16xf32> to vector<16x1xf32>
    %20 = arith.maximumf %17, %19 : vector<16x1xf32>
    %21 = arith.subf %17, %20 : vector<16x1xf32>
    %22 = math.exp %21 : vector<16x1xf32>
    %23 = vector.broadcast %20 : vector<16x1xf32> to vector<16x16xf32>
    %24 = arith.subf %16, %23 : vector<16x16xf32>
    %25 = arith.truncf %24 : vector<16x16xf32> to vector<16x16xbf16>
    %26 = math.exp %25 : vector<16x16xbf16>
    %27 = vector.extract_strided_slice %10 {offsets = [0, 0], sizes = [16, 1], strides = [1, 1]} : vector<16x4xf32> to vector<16x1xf32>
    %28 = arith.mulf %22, %27 : vector<16x1xf32>
    %29 = arith.extf %26 : vector<16x16xbf16> to vector<16x16xf32>
    %cst_14 = arith.constant dense<0.000000e+00> : vector<16xf32>
    %30 = vector.multi_reduction <add>, %29, %cst_14 [1] : vector<16x16xf32> to vector<16xf32>
    %31 = vector.shape_cast %30 : vector<16xf32> to vector<16x1xf32>
    %32 = arith.addf %28, %31 : vector<16x1xf32>
    %cst_15 = arith.constant dense<0.000000e+00> : vector<16x8xf32>
    %33 = tpu.matmul %26, %13, %cst_15 {dimension_numbers = #tpu.dot_dimension_numbers<[1], [0], [0], [1], [0, 0, 1, 1], [], []>} : vector<16x16xbf16>, vector<16x8xbf16>, vector<16x8xf32> -> vector<16x8xf32>
    %34 = vector.extract_strided_slice %4 {offsets = [0, 8], sizes = [16, 8], strides = [1, 1]} : vector<16x32xbf16> to vector<16x8xbf16>
    %35 = vector.extract_strided_slice %6 {offsets = [0, 8], sizes = [16, 8], strides = [1, 1]} : vector<16x64xbf16> to vector<16x8xbf16>
    %36 = vector.extract_strided_slice %6 {offsets = [0, 40], sizes = [16, 8], strides = [1, 1]} : vector<16x64xbf16> to vector<16x8xbf16>
    %cst_16 = arith.constant dense<0.000000e+00> : vector<16x16xf32>
    %37 = tpu.matmul %34, %35, %cst_16 {dimension_numbers = #tpu.dot_dimension_numbers<[1], [1], [0], [0], [0, 0, 1, 0], [], []>} : vector<16x8xbf16>, vector<16x8xbf16>, vector<16x16xf32> -> vector<16x16xf32>
    %38 = vector.broadcast %8 : vector<1x16xf32> to vector<16x16xf32>
    %39 = arith.addf %37, %38 : vector<16x16xf32>
    %40 = vector.extract_strided_slice %9 {offsets = [0, 1], sizes = [16, 1], strides = [1, 1]} : vector<16x4xf32> to vector<16x1xf32>
    %cst_17 = arith.constant dense<0xFF800000> : vector<16xf32>
    %41 = vector.multi_reduction <maximumf>, %39, %cst_17 [1] : vector<16x16xf32> to vector<16xf32>
    %42 = vector.shape_cast %41 : vector<16xf32> to vector<16x1xf32>
    %43 = arith.maximumf %40, %42 : vector<16x1xf32>
    %44 = arith.subf %40, %43 : vector<16x1xf32>
    %45 = math.exp %44 : vector<16x1xf32>
    %46 = vector.broadcast %43 : vector<16x1xf32> to vector<16x16xf32>
    %47 = arith.subf %39, %46 : vector<16x16xf32>
    %48 = arith.truncf %47 : vector<16x16xf32> to vector<16x16xbf16>
    %49 = math.exp %48 : vector<16x16xbf16>
    %50 = vector.extract_strided_slice %10 {offsets = [0, 1], sizes = [16, 1], strides = [1, 1]} : vector<16x4xf32> to vector<16x1xf32>
    %51 = arith.mulf %45, %50 : vector<16x1xf32>
    %52 = arith.extf %49 : vector<16x16xbf16> to vector<16x16xf32>
    %cst_18 = arith.constant dense<0.000000e+00> : vector<16xf32>
    %53 = vector.multi_reduction <add>, %52, %cst_18 [1] : vector<16x16xf32> to vector<16xf32>
    %54 = vector.shape_cast %53 : vector<16xf32> to vector<16x1xf32>
    %55 = arith.addf %51, %54 : vector<16x1xf32>
    %cst_19 = arith.constant dense<0.000000e+00> : vector<16x8xf32>
    %56 = tpu.matmul %49, %36, %cst_19 {dimension_numbers = #tpu.dot_dimension_numbers<[1], [0], [0], [1], [0, 0, 1, 1], [], []>} : vector<16x16xbf16>, vector<16x8xbf16>, vector<16x8xf32> -> vector<16x8xf32>
    %57 = vector.extract_strided_slice %4 {offsets = [0, 16], sizes = [16, 8], strides = [1, 1]} : vector<16x32xbf16> to vector<16x8xbf16>
    %58 = vector.extract_strided_slice %6 {offsets = [0, 16], sizes = [16, 8], strides = [1, 1]} : vector<16x64xbf16> to vector<16x8xbf16>
    %59 = vector.extract_strided_slice %6 {offsets = [0, 48], sizes = [16, 8], strides = [1, 1]} : vector<16x64xbf16> to vector<16x8xbf16>
    %cst_20 = arith.constant dense<0.000000e+00> : vector<16x16xf32>
    %60 = tpu.matmul %57, %58, %cst_20 {dimension_numbers = #tpu.dot_dimension_numbers<[1], [1], [0], [0], [0, 0, 1, 0], [], []>} : vector<16x8xbf16>, vector<16x8xbf16>, vector<16x16xf32> -> vector<16x16xf32>
    %61 = vector.broadcast %8 : vector<1x16xf32> to vector<16x16xf32>
    %62 = arith.addf %60, %61 : vector<16x16xf32>
    %63 = vector.extract_strided_slice %9 {offsets = [0, 2], sizes = [16, 1], strides = [1, 1]} : vector<16x4xf32> to vector<16x1xf32>
    %cst_21 = arith.constant dense<0xFF800000> : vector<16xf32>
    %64 = vector.multi_reduction <maximumf>, %62, %cst_21 [1] : vector<16x16xf32> to vector<16xf32>
    %65 = vector.shape_cast %64 : vector<16xf32> to vector<16x1xf32>
    %66 = arith.maximumf %63, %65 : vector<16x1xf32>
    %67 = arith.subf %63, %66 : vector<16x1xf32>
    %68 = math.exp %67 : vector<16x1xf32>
    %69 = vector.broadcast %66 : vector<16x1xf32> to vector<16x16xf32>
    %70 = arith.subf %62, %69 : vector<16x16xf32>
    %71 = arith.truncf %70 : vector<16x16xf32> to vector<16x16xbf16>
    %72 = math.exp %71 : vector<16x16xbf16>
    %73 = vector.extract_strided_slice %10 {offsets = [0, 2], sizes = [16, 1], strides = [1, 1]} : vector<16x4xf32> to vector<16x1xf32>
    %74 = arith.mulf %68, %73 : vector<16x1xf32>
    %75 = arith.extf %72 : vector<16x16xbf16> to vector<16x16xf32>
    %cst_22 = arith.constant dense<0.000000e+00> : vector<16xf32>
    %76 = vector.multi_reduction <add>, %75, %cst_22 [1] : vector<16x16xf32> to vector<16xf32>
    %77 = vector.shape_cast %76 : vector<16xf32> to vector<16x1xf32>
    %78 = arith.addf %74, %77 : vector<16x1xf32>
    %cst_23 = arith.constant dense<0.000000e+00> : vector<16x8xf32>
    %79 = tpu.matmul %72, %59, %cst_23 {dimension_numbers = #tpu.dot_dimension_numbers<[1], [0], [0], [1], [0, 0, 1, 1], [], []>} : vector<16x16xbf16>, vector<16x8xbf16>, vector<16x8xf32> -> vector<16x8xf32>
    %80 = vector.extract_strided_slice %4 {offsets = [0, 24], sizes = [16, 8], strides = [1, 1]} : vector<16x32xbf16> to vector<16x8xbf16>
    %81 = vector.extract_strided_slice %6 {offsets = [0, 24], sizes = [16, 8], strides = [1, 1]} : vector<16x64xbf16> to vector<16x8xbf16>
    %82 = vector.extract_strided_slice %6 {offsets = [0, 56], sizes = [16, 8], strides = [1, 1]} : vector<16x64xbf16> to vector<16x8xbf16>
    %cst_24 = arith.constant dense<0.000000e+00> : vector<16x16xf32>
    %83 = tpu.matmul %80, %81, %cst_24 {dimension_numbers = #tpu.dot_dimension_numbers<[1], [1], [0], [0], [0, 0, 1, 0], [], []>} : vector<16x8xbf16>, vector<16x8xbf16>, vector<16x16xf32> -> vector<16x16xf32>
    %84 = vector.broadcast %8 : vector<1x16xf32> to vector<16x16xf32>
    %85 = arith.addf %83, %84 : vector<16x16xf32>
    %86 = vector.extract_strided_slice %9 {offsets = [0, 3], sizes = [16, 1], strides = [1, 1]} : vector<16x4xf32> to vector<16x1xf32>
    %cst_25 = arith.constant dense<0xFF800000> : vector<16xf32>
    %87 = vector.multi_reduction <maximumf>, %85, %cst_25 [1] : vector<16x16xf32> to vector<16xf32>
    %88 = vector.shape_cast %87 : vector<16xf32> to vector<16x1xf32>
    %89 = arith.maximumf %86, %88 : vector<16x1xf32>
    %90 = arith.subf %86, %89 : vector<16x1xf32>
    %91 = math.exp %90 : vector<16x1xf32>
    %92 = vector.broadcast %89 : vector<16x1xf32> to vector<16x16xf32>
    %93 = arith.subf %85, %92 : vector<16x16xf32>
    %94 = arith.truncf %93 : vector<16x16xf32> to vector<16x16xbf16>
    %95 = math.exp %94 : vector<16x16xbf16>
    %96 = vector.extract_strided_slice %10 {offsets = [0, 3], sizes = [16, 1], strides = [1, 1]} : vector<16x4xf32> to vector<16x1xf32>
    %97 = arith.mulf %91, %96 : vector<16x1xf32>
    %98 = arith.extf %95 : vector<16x16xbf16> to vector<16x16xf32>
    %cst_26 = arith.constant dense<0.000000e+00> : vector<16xf32>
    %99 = vector.multi_reduction <add>, %98, %cst_26 [1] : vector<16x16xf32> to vector<16xf32>
    %100 = vector.shape_cast %99 : vector<16xf32> to vector<16x1xf32>
    %101 = arith.addf %97, %100 : vector<16x1xf32>
    %cst_27 = arith.constant dense<0.000000e+00> : vector<16x8xf32>
    %102 = tpu.matmul %95, %82, %cst_27 {dimension_numbers = #tpu.dot_dimension_numbers<[1], [0], [0], [1], [0, 0, 1, 1], [], []>} : vector<16x16xbf16>, vector<16x8xbf16>, vector<16x8xf32> -> vector<16x8xf32>
    %103 = tpu.concatenate %33, %56, %79, %102 in 1 : vector<16x8xf32>, vector<16x8xf32>, vector<16x8xf32>, vector<16x8xf32> -> vector<16x32xf32>
    %104 = vector.shape_cast %22 : vector<16x1xf32> to vector<16x1xf32>
    %105 = vector.broadcast %104 : vector<16x1xf32> to vector<16x8xf32>
    %106 = vector.shape_cast %45 : vector<16x1xf32> to vector<16x1xf32>
    %107 = vector.broadcast %106 : vector<16x1xf32> to vector<16x8xf32>
    %108 = vector.shape_cast %68 : vector<16x1xf32> to vector<16x1xf32>
    %109 = vector.broadcast %108 : vector<16x1xf32> to vector<16x8xf32>
    %110 = vector.shape_cast %91 : vector<16x1xf32> to vector<16x1xf32>
    %111 = vector.broadcast %110 : vector<16x1xf32> to vector<16x8xf32>
    %112 = tpu.concatenate %105, %107, %109, %111 in 1 : vector<16x8xf32>, vector<16x8xf32>, vector<16x8xf32>, vector<16x8xf32> -> vector<16x32xf32>
    %c0_28 = arith.constant 0 : index
    %c0_29 = arith.constant 0 : index
    %113 = vector.load %arg12[%c0_28, %c0_29] : memref<16x32xf32, #tpu.memory_space<vmem>>, vector<16x32xf32>
    %114 = arith.mulf %112, %113 : vector<16x32xf32>
    %115 = arith.addf %114, %103 : vector<16x32xf32>
    %c0_30 = arith.constant 0 : index
    %c0_31 = arith.constant 0 : index
    %116 = vector.load %arg12[%c0_30, %c0_31] : memref<16x32xf32, #tpu.memory_space<vmem>>, vector<16x32xf32>
    tpu.vector_store %arg12[%c0_30, %c0_31], %115 {strides = array<i32>} : memref<16x32xf32, #tpu.memory_space<vmem>>, vector<16x32xf32>,
    %117 = tpu.concatenate %20, %43, %66, %89 in 1 : vector<16x1xf32>, vector<16x1xf32>, vector<16x1xf32>, vector<16x1xf32> -> vector<16x4xf32>
    %c0_32 = arith.constant 0 : index
    %c0_33 = arith.constant 0 : index
    %118 = vector.load %arg13[%c0_32, %c0_33] : memref<16x4xf32, #tpu.memory_space<vmem>>, vector<16x4xf32>
    tpu.vector_store %arg13[%c0_32, %c0_33], %117 {strides = array<i32>} : memref<16x4xf32, #tpu.memory_space<vmem>>, vector<16x4xf32>,
    %119 = tpu.concatenate %32, %55, %78, %101 in 1 : vector<16x1xf32>, vector<16x1xf32>, vector<16x1xf32>, vector<16x1xf32> -> vector<16x4xf32>
    %c0_34 = arith.constant 0 : index
    %c0_35 = arith.constant 0 : index
    %120 = vector.load %arg14[%c0_34, %c0_35] : memref<16x4xf32, #tpu.memory_space<vmem>>, vector<16x4xf32>
    tpu.vector_store %arg14[%c0_34, %c0_35], %119 {strides = array<i32>} : memref<16x4xf32, #tpu.memory_space<vmem>>, vector<16x4xf32>,
    %c0_i32_36 = arith.constant 0 : i32
    %121 = arith.cmpi eq, %arg2, %c0_i32_36 : i32
    %122 = arith.extui %121 : i1 to i32
    %c0_i32_37 = arith.constant 0 : i32
    %123 = arith.cmpi ne, %122, %c0_i32_37 : i32
    scf.if %123 {
      %c0_38 = arith.constant 0 : index
      %c0_39 = arith.constant 0 : index
      %124 = vector.load %arg14[%c0_38, %c0_39] : memref<16x4xf32, #tpu.memory_space<vmem>>, vector<16x4xf32>
      %125 = tpu.reciprocal %124 : vector<16x4xf32> -> vector<16x4xf32>
      %126 = vector.extract_strided_slice %125 {offsets = [0, 0], sizes = [16, 1], strides = [1, 1]} : vector<16x4xf32> to vector<16x1xf32>
      %127 = vector.shape_cast %126 : vector<16x1xf32> to vector<16x1xf32>
      %128 = vector.broadcast %127 : vector<16x1xf32> to vector<16x8xf32>
      %129 = vector.extract_strided_slice %125 {offsets = [0, 1], sizes = [16, 1], strides = [1, 1]} : vector<16x4xf32> to vector<16x1xf32>
      %130 = vector.shape_cast %129 : vector<16x1xf32> to vector<16x1xf32>
      %131 = vector.broadcast %130 : vector<16x1xf32> to vector<16x8xf32>
      %132 = vector.extract_strided_slice %125 {offsets = [0, 2], sizes = [16, 1], strides = [1, 1]} : vector<16x4xf32> to vector<16x1xf32>
      %133 = vector.shape_cast %132 : vector<16x1xf32> to vector<16x1xf32>
      %134 = vector.broadcast %133 : vector<16x1xf32> to vector<16x8xf32>
      %135 = vector.extract_strided_slice %125 {offsets = [0, 3], sizes = [16, 1], strides = [1, 1]} : vector<16x4xf32> to vector<16x1xf32>
      %136 = vector.shape_cast %135 : vector<16x1xf32> to vector<16x1xf32>
      %137 = vector.broadcast %136 : vector<16x1xf32> to vector<16x8xf32>
      %138 = tpu.concatenate %128, %131, %134, %137 in 1 : vector<16x8xf32>, vector<16x8xf32>, vector<16x8xf32>, vector<16x8xf32> -> vector<16x32xf32>
      %c0_40 = arith.constant 0 : index
      %c0_41 = arith.constant 0 : index
      %c0_42 = arith.constant 0 : index
      %139 = vector.load %arg6[%c0_40, %c0_41, %c0_42] : memref<1x16x32xbf16, #tpu.memory_space<vmem>>, vector<1x16x32xbf16>
      %140 = vector.shape_cast %139 : vector<1x16x32xbf16> to vector<16x32xbf16>
      %c0_43 = arith.constant 0 : index
      %c0_44 = arith.constant 0 : index
      %141 = vector.load %arg7[%c0_43, %c0_44] : memref<32x32xbf16, #tpu.memory_space<vmem>>, vector<32x32xbf16>
      %cst_45 = arith.constant dense<0.000000e+00> : vector<16x32xf32>
      %142 = tpu.matmul %140, %141, %cst_45 {dimension_numbers = #tpu.dot_dimension_numbers<[1], [0], [0], [1], [0, 0, 1, 1], [], []>} : vector<16x32xbf16>, vector<32x32xbf16>, vector<16x32xf32> -> vector<16x32xf32>
      %c0_46 = arith.constant 0 : index
      %c0_47 = arith.constant 0 : index
      %143 = vector.load %arg8[%c0_46, %c0_47] : memref<1x32xf32, #tpu.memory_space<vmem>>, vector<1x32xf32>
      %144 = vector.broadcast %143 : vector<1x32xf32> to vector<16x32xf32>
      %145 = arith.addf %142, %144 : vector<16x32xf32>
      %146 = arith.negf %145 : vector<16x32xf32>
      %147 = math.exp %146 : vector<16x32xf32>
      %cst_48 = arith.constant 1.000000e+00 : f32
      %148 = vector.broadcast %cst_48 : f32 to vector<16x32xf32>
      %149 = arith.addf %148, %147 : vector<16x32xf32>
      %150 = arith.divf %148, %149 : vector<16x32xf32>
      %c0_49 = arith.constant 0 : index
      %c0_50 = arith.constant 0 : index
      %151 = vector.load %arg12[%c0_49, %c0_50] : memref<16x32xf32, #tpu.memory_space<vmem>>, vector<16x32xf32>
      %152 = arith.mulf %151, %138 : vector<16x32xf32>
      %153 = arith.mulf %152, %150 : vector<16x32xf32>
      %154 = arith.truncf %153 : vector<16x32xf32> to vector<16x32xbf16>
      %c0_51 = arith.constant 0 : index
      %c0_52 = arith.constant 0 : index
      %155 = vector.load %arg9[%c0_51, %c0_52] : memref<32x32xbf16, #tpu.memory_space<vmem>>, vector<32x32xbf16>
      %cst_53 = arith.constant dense<0.000000e+00> : vector<16x32xf32>
      %156 = tpu.matmul %154, %155, %cst_53 {dimension_numbers = #tpu.dot_dimension_numbers<[1], [0], [0], [1], [0, 0, 1, 1], [], []>} : vector<16x32xbf16>, vector<32x32xbf16>, vector<16x32xf32> -> vector<16x32xf32>
      %c0_54 = arith.constant 0 : index
      %c0_55 = arith.constant 0 : index
      %157 = vector.load %arg10[%c0_54, %c0_55] : memref<1x32xf32, #tpu.memory_space<vmem>>, vector<1x32xf32>
      %158 = vector.broadcast %157 : vector<1x32xf32> to vector<16x32xf32>
      %159 = arith.addf %156, %158 : vector<16x32xf32>
      %c0_56 = arith.constant 0 : index
      %c0_57 = arith.constant 0 : index
      %c0_58 = arith.constant 0 : index
      %160 = vector.load %arg11[%c0_56, %c0_57, %c0_58] : memref<1x16x32xf32, #tpu.memory_space<vmem>>, vector<1x16x32xf32>
      %161 = vector.shape_cast %160 : vector<1x16x32xf32> to vector<16x32xf32>
      %162 = vector.shape_cast %159 : vector<16x32xf32> to vector<1x16x32xf32>
      tpu.vector_store %arg11[%c0_56, %c0_57, %c0_58], %162 {strides = array<i32>} : memref<1x16x32xf32, #tpu.memory_space<vmem>>, vector<1x16x32xf32>,
    } else {
    }
    return
  }
  func.func @transform_0(%arg0: i32, %arg1: i32, %arg2: i32) -> (i32, i32, i32) {
    %c0_i32 = arith.constant 0 : i32
    %c0_i32_0 = arith.constant 0 : i32
    return %arg0, %arg1, %c0_i32 : i32, i32, i32
  }
  func.func @transform_1(%arg0: i32, %arg1: i32, %arg2: i32) -> (i32, i32, i32) {
    %c0_i32 = arith.constant 0 : i32
    %c0_i32_0 = arith.constant 0 : i32
    return %arg0, %arg2, %c0_i32 : i32, i32, i32
  }
  func.func @transform_2(%arg0: i32, %arg1: i32, %arg2: i32) -> (i32, i32, i32) {
    %c0_i32 = arith.constant 0 : i32
    %c0_i32_0 = arith.constant 0 : i32
    return %arg0, %c0_i32, %arg2 : i32, i32, i32
  }
  func.func @transform_3(%arg0: i32, %arg1: i32, %arg2: i32) -> (i32, i32, i32) {
    %c0_i32 = arith.constant 0 : i32
    %c0_i32_0 = arith.constant 0 : i32
    return %arg0, %arg1, %c0_i32 : i32, i32, i32
  }
  func.func @transform_4(%arg0: i32, %arg1: i32, %arg2: i32) -> (i32, i32) {
    %c0_i32 = arith.constant 0 : i32
    %c0_i32_0 = arith.constant 0 : i32
    %c0_i32_1 = arith.constant 0 : i32
    return %c0_i32, %c0_i32_0 : i32, i32
  }
  func.func @transform_5(%arg0: i32, %arg1: i32, %arg2: i32) -> (i32, i32) {
    %c0_i32 = arith.constant 0 : i32
    %c0_i32_0 = arith.constant 0 : i32
    %c0_i32_1 = arith.constant 0 : i32
    return %c0_i32, %c0_i32_0 : i32, i32
  }
  func.func @transform_6(%arg0: i32, %arg1: i32, %arg2: i32) -> (i32, i32) {
    %c0_i32 = arith.constant 0 : i32
    %c0_i32_0 = arith.constant 0 : i32
    %c0_i32_1 = arith.constant 0 : i32
    return %c0_i32, %c0_i32_0 : i32, i32
  }
  func.func @transform_7(%arg0: i32, %arg1: i32, %arg2: i32) -> (i32, i32) {
    %c0_i32 = arith.constant 0 : i32
    %c0_i32_0 = arith.constant 0 : i32
    %c0_i32_1 = arith.constant 0 : i32
    return %c0_i32, %c0_i32_0 : i32, i32
  }
  func.func @transform_8(%arg0: i32, %arg1: i32, %arg2: i32) -> (i32, i32, i32) {
    %c0_i32 = arith.constant 0 : i32
    %c0_i32_0 = arith.constant 0 : i32
    return %arg0, %arg1, %c0_i32 : i32, i32, i32
  }
}

</mosaic_0001>

<llo_original>
// kernel: tpu_custom_call.1
$region0: #{tpu_custom_call.1}
  #allocation0 [shape = 'u32[]', space=smem, size = 0x4, offset = 0x4, fixed_abs, tag = 'smem constant byte address 0x4 - core index']
  #allocation1 [shape = 'u32[144,128]{1,0:T(1,128)}', space=vmem, size = 0x12000, scoped, tag = 'internal scratch']
  #allocation2 [shape = 'f32[16,32]{1,0:T(8,128)}', space=vmem, size = 0x2000, scoped, tag = 'scratch operand']
  #allocation3 [shape = 'f32[16,4]{1,0:T(8,128)}', space=vmem, size = 0x2000, scoped, tag = 'scratch operand']
  #allocation4 [shape = 'f32[16,4]{1,0:T(8,128)}', space=vmem, size = 0x2000, scoped, tag = 'scratch operand']
  %s0 = inlined_call_operand.hbm [shape: bf16[2,16,32], index: 0, kind: input, shape index: {}]
  %s1 = inlined_call_operand.hbm [shape: bf16[2,16,64], index: 1, kind: input, shape index: {}]
  %s2 = inlined_call_operand.vmem [shape: f32[2,1,16], index: 2, kind: input, shape index: {}]
  %s3 = inlined_call_operand.hbm [shape: bf16[2,16,32], index: 3, kind: input, shape index: {}]
  %s4 = inlined_call_operand.hbm [shape: bf16[32,32], index: 4, kind: input, shape index: {}]
  %s5 = inlined_call_operand.vmem [shape: f32[1,32], index: 5, kind: input, shape index: {}]
  %s6 = inlined_call_operand.vmem [shape: bf16[32,32], index: 6, kind: input, shape index: {}]
  %s7 = inlined_call_operand.vmem [shape: f32[1,32], index: 7, kind: input, shape index: {}]
  %s8 = inlined_call_operand.hbm [shape: f32[2,16,32], index: 8, kind: output, shape index: {}]
  %s9 = sld [smem:[#allocation0]]
  $region89: #{tpu_custom_call.1} parent=0
    _
  %s11 = ssub.s32 1, %s9
  %s12 = scalar_select 0, %s11, %s9
  $region1: #{tpu_custom_call.1} parent=0
    #allocation5 [shape = 'u8[8192]{0}', space=vmem, size = 0x2000, scoped, tag = 'input window, operand 0']
    #allocation6 [shape = 's32[2]{0}', space=sflag, size = 0x8, scoped, tag = 'scoped memory for tpu_custom_call.1']
    #allocation7 [shape = 's32[2]{0}', space=sflag, size = 0x8, scoped, tag = 'scoped memory for tpu_custom_call.1']
    #allocation8 [shape = 'u8[8192]{0}', space=vmem, size = 0x2000, scoped, tag = 'input window, operand 1']
    #allocation9 [shape = 's32[2]{0}', space=sflag, size = 0x8, scoped, tag = 'scoped memory for tpu_custom_call.1']
    #allocation10 [shape = 'u8[8192]{0}', space=vmem, size = 0x2000, scoped, tag = 'input window, operand 3']
    #allocation11 [shape = 'u8[8192]{0}', space=vmem, size = 0x2000, scoped, tag = 'input window, operand 4, single buffered']
    #allocation12 [shape = 's32[1]{0}', space=sflag, size = 0x4, scoped, tag = 'scoped memory for tpu_custom_call.1']
    #allocation13 [shape = 'u8[16384]{0}', space=vmem, size = 0x4000, scoped, tag = 'output window, operand 0']
    %13 = vsyncpa [#allocation6], 0
    %s14 = scalar_lea.sflag [#allocation6], 1
    %15 = vsyncpa %s14, 0
    %16 = vsyncpa [#allocation9], 0
    %s17 = scalar_lea.sflag [#allocation9], 1
    %18 = vsyncpa %s17, 0
    %19 = vsyncpa [#allocation12], 0
    %20 = vsyncpa [#allocation7], 0
    %s21 = scalar_lea.sflag [#allocation7], 1
    %22 = vsyncpa %s21, 0
    loop: start=0, step=1, limit=4
    $region2: #{tpu_custom_call.1} parent=1 // loop_pre_header
      _
    $region3: #{tpu_custom_call.1} parent=1 // loop_header
      %s24 = sphi 0, %s28
      %p25 = scmp.ge.s32.totalorder %s24, 4
      %s31 = sphi 0, %s50
      %s32 = sphi 0, %s46
      %s33 = sphi 0, %s42
      %s34 = sphi 0, %s31
      %s35 = sphi 0, %s32
      %s36 = sphi 0, %s33
      %s37 = sphi 0, %s34
      %s38 = sphi 0, %s35
      %s39 = sphi 0, %s36
      %s55 = sphi 0, %s57
      %s58 = sphi 0, %s55
      %s59 = sphi 0, %s58
      %s75 = sphi 0, %s59
      %s83 = sphi 0, %s85
      %s86 = sphi 0, %s83
      %s87 = sphi 0, %s86
      %s103 = sphi 0, %s87
      %s111 = sphi 0, %s113
      %s114 = sphi 0, %s111
      %s115 = sphi 0, %s114
      %s131 = sphi 0, %s115
      %s139 = sphi 0, %s141
      %s142 = sphi 0, %s139
      %s143 = sphi 0, %s142
      %s159 = sphi 0, %s143
      %s163 = sphi 0, %s163
      %s165 = sphi 0, %s163
      %s166 = sphi 0, %s165
      %s180 = sphi 0, %s166
      %s184 = sphi 0, %s184
      %s186 = sphi 0, %s184
      %s187 = sphi 0, %s186
      %s201 = sphi 0, %s187
      %s205 = sphi 0, %s205
      %s207 = sphi 0, %s205
      %s208 = sphi 0, %s207
      %s222 = sphi 0, %s208
      %s226 = sphi 0, %s226
      %s228 = sphi 0, %s226
      %s229 = sphi 0, %s228
      %s243 = sphi 0, %s229
      %s251 = sphi 0, %s253
      %s254 = sphi 0, %s251
      %s255 = sphi 0, %s254
      %s271 = sphi 0, %s255
    $region4: #{tpu_custom_call.1} parent=1 // loop_header_branch
      %27 = sbr.rel (%p25) target = $region8
    $region5: #{tpu_custom_call.1} parent=1 // loop_body
      %s29 = ssub.s32 %s24, 1
      %s30 = ssub.s32 %s24, 2
      %s40 = sadd.s32 1, %s33
      %p41 = scmp.ge.s32.totalorder %s40, 1
      %s42 = scalar_select %p41, 0, %s40
      %s43 = sadd.s32 1, %s32
      %s44 = scalar_select %p41, %s43, %s32
      %p45 = scmp.ge.s32.totalorder %s44, 1
      %s46 = scalar_select %p45, 0, %s44
      %s47 = sadd.s32 1, %s31
      %s48 = scalar_select %p45, %s47, %s31
      %p49 = scmp.ge.s32.totalorder %s48, 2
      %s50 = scalar_select %p49, 0, %s48
      %s51 = ssub.s32 %s31, %s50
      %s52 = ssub.s32 %s32, %s46
      %s53 = sor.u32 %s51, %s52
      %p54 = scmp.eq.s32.totalorder %s53, 0
      %s56 = sadd.s32 %s55, 1
      %s57 = scalar_select %p54, %s55, %s56
      %p60 = pneg %p54
      %p61 = scmp.eq.s32.totalorder %s24, 1
      %p62 = por %p60, %p61
      %p63 = scmp.ne.s32.totalorder %s55, %s58
      %p64 = scmp.eq.s32.totalorder %s24, 0
      %p65 = por %p63, %p64
      %p66 = scmp.ne.s32.totalorder %s55, %s58
      %p67 = scmp.eq.s32.totalorder %s29, 1
      %p68 = por %p66, %p67
      %p69 = scmp.ne.s32.totalorder %s58, %s59
      %p70 = scmp.eq.s32.totalorder %s29, 0
      %p71 = por %p69, %p70
      %p72 = scmp.ne.s32.totalorder %s58, %s59
      %p73 = scmp.eq.s32.totalorder %s30, 1
      %p74 = por %p72, %p73
      %p76 = scmp.ne.s32.totalorder %s59, %s75
      %p77 = scmp.eq.s32.totalorder %s30, 0
      %p78 = por %p76, %p77
      %s79 = ssub.s32 %s31, %s50
      %s80 = ssub.s32 %s33, %s42
      %s81 = sor.u32 %s79, %s80
      %p82 = scmp.eq.s32.totalorder %s81, 0
      %s84 = sadd.s32 %s83, 1
      %s85 = scalar_select %p82, %s83, %s84
      %p88 = pneg %p82
      %p89 = scmp.eq.s32.totalorder %s24, 1
      %p90 = por %p88, %p89
      %p91 = scmp.ne.s32.totalorder %s83, %s86
      %p92 = scmp.eq.s32.totalorder %s24, 0
      %p93 = por %p91, %p92
      %p94 = scmp.ne.s32.totalorder %s83, %s86
      %p95 = scmp.eq.s32.totalorder %s29, 1
      %p96 = por %p94, %p95
      %p97 = scmp.ne.s32.totalorder %s86, %s87
      %p98 = scmp.eq.s32.totalorder %s29, 0
      %p99 = por %p97, %p98
      %p100 = scmp.ne.s32.totalorder %s86, %s87
      %p101 = scmp.eq.s32.totalorder %s30, 1
      %p102 = por %p100, %p101
      %p104 = scmp.ne.s32.totalorder %s87, %s103
      %p105 = scmp.eq.s32.totalorder %s30, 0
      %p106 = por %p104, %p105
      %s107 = ssub.s32 %s31, %s50
      %s108 = ssub.s32 %s33, %s42
      %s109 = sor.u32 %s107, %s108
      %p110 = scmp.eq.s32.totalorder %s109, 0
      %s112 = sadd.s32 %s111, 1
      %s113 = scalar_select %p110, %s111, %s112
      %p116 = pneg %p110
      %p117 = scmp.eq.s32.totalorder %s24, 1
      %p118 = por %p116, %p117
      %p119 = scmp.ne.s32.totalorder %s111, %s114
      %p120 = scmp.eq.s32.totalorder %s24, 0
      %p121 = por %p119, %p120
      %p122 = scmp.ne.s32.totalorder %s111, %s114
      %p123 = scmp.eq.s32.totalorder %s29, 1
      %p124 = por %p122, %p123
      %p125 = scmp.ne.s32.totalorder %s114, %s115
      %p126 = scmp.eq.s32.totalorder %s29, 0
      %p127 = por %p125, %p126
      %p128 = scmp.ne.s32.totalorder %s114, %s115
      %p129 = scmp.eq.s32.totalorder %s30, 1
      %p130 = por %p128, %p129
      %p132 = scmp.ne.s32.totalorder %s115, %s131
      %p133 = scmp.eq.s32.totalorder %s30, 0
      %p134 = por %p132, %p133
      %s135 = ssub.s32 %s31, %s50
      %s136 = ssub.s32 %s32, %s46
      %s137 = sor.u32 %s135, %s136
      %p138 = scmp.eq.s32.totalorder %s137, 0
      %s140 = sadd.s32 %s139, 1
      %s141 = scalar_select %p138, %s139, %s140
      %p144 = pneg %p138
      %p145 = scmp.eq.s32.totalorder %s24, 1
      %p146 = por %p144, %p145
      %p147 = scmp.ne.s32.totalorder %s139, %s142
      %p148 = scmp.eq.s32.totalorder %s24, 0
      %p149 = por %p147, %p148
      %p150 = scmp.ne.s32.totalorder %s139, %s142
      %p151 = scmp.eq.s32.totalorder %s29, 1
      %p152 = por %p150, %p151
      %p153 = scmp.ne.s32.totalorder %s142, %s143
      %p154 = scmp.eq.s32.totalorder %s29, 0
      %p155 = por %p153, %p154
      %p156 = scmp.ne.s32.totalorder %s142, %s143
      %p157 = scmp.eq.s32.totalorder %s30, 1
      %p158 = por %p156, %p157
      %p160 = scmp.ne.s32.totalorder %s143, %s159
      %p161 = scmp.eq.s32.totalorder %s30, 0
      %p162 = por %p160, %p161
      %s164 = sadd.s32 %s163, 1
      %p167 = scmp.eq.s32.totalorder %s24, 1
      %p168 = scmp.ne.s32.totalorder %s163, %s165
      %p169 = scmp.eq.s32.totalorder %s24, 0
      %p170 = por %p168, %p169
      %p171 = scmp.ne.s32.totalorder %s163, %s165
      %p172 = scmp.eq.s32.totalorder %s29, 1
      %p173 = por %p171, %p172
      %p174 = scmp.ne.s32.totalorder %s165, %s166
      %p175 = scmp.eq.s32.totalorder %s29, 0
      %p176 = por %p174, %p175
      %p177 = scmp.ne.s32.totalorder %s165, %s166
      %p178 = scmp.eq.s32.totalorder %s30, 1
      %p179 = por %p177, %p178
      %p181 = scmp.ne.s32.totalorder %s166, %s180
      %p182 = scmp.eq.s32.totalorder %s30, 0
      %p183 = por %p181, %p182
      %s185 = sadd.s32 %s184, 1
      %p188 = scmp.eq.s32.totalorder %s24, 1
      %p189 = scmp.ne.s32.totalorder %s184, %s186
      %p190 = scmp.eq.s32.totalorder %s24, 0
      %p191 = por %p189, %p190
      %p192 = scmp.ne.s32.totalorder %s184, %s186
      %p193 = scmp.eq.s32.totalorder %s29, 1
      %p194 = por %p192, %p193
      %p195 = scmp.ne.s32.totalorder %s186, %s187
      %p196 = scmp.eq.s32.totalorder %s29, 0
      %p197 = por %p195, %p196
      %p198 = scmp.ne.s32.totalorder %s186, %s187
      %p199 = scmp.eq.s32.totalorder %s30, 1
      %p200 = por %p198, %p199
      %p202 = scmp.ne.s32.totalorder %s187, %s201
      %p203 = scmp.eq.s32.totalorder %s30, 0
      %p204 = por %p202, %p203
      %s206 = sadd.s32 %s205, 1
      %p209 = scmp.eq.s32.totalorder %s24, 1
      %p210 = scmp.ne.s32.totalorder %s205, %s207
      %p211 = scmp.eq.s32.totalorder %s24, 0
      %p212 = por %p210, %p211
      %p213 = scmp.ne.s32.totalorder %s205, %s207
      %p214 = scmp.eq.s32.totalorder %s29, 1
      %p215 = por %p213, %p214
      %p216 = scmp.ne.s32.totalorder %s207, %s208
      %p217 = scmp.eq.s32.totalorder %s29, 0
      %p218 = por %p216, %p217
      %p219 = scmp.ne.s32.totalorder %s207, %s208
      %p220 = scmp.eq.s32.totalorder %s30, 1
      %p221 = por %p219, %p220
      %p223 = scmp.ne.s32.totalorder %s208, %s222
      %p224 = scmp.eq.s32.totalorder %s30, 0
      %p225 = por %p223, %p224
      %s227 = sadd.s32 %s226, 1
      %p230 = scmp.eq.s32.totalorder %s24, 1
      %p231 = scmp.ne.s32.totalorder %s226, %s228
      %p232 = scmp.eq.s32.totalorder %s24, 0
      %p233 = por %p231, %p232
      %p234 = scmp.ne.s32.totalorder %s226, %s228
      %p235 = scmp.eq.s32.totalorder %s29, 1
      %p236 = por %p234, %p235
      %p237 = scmp.ne.s32.totalorder %s228, %s229
      %p238 = scmp.eq.s32.totalorder %s29, 0
      %p239 = por %p237, %p238
      %p240 = scmp.ne.s32.totalorder %s228, %s229
      %p241 = scmp.eq.s32.totalorder %s30, 1
      %p242 = por %p240, %p241
      %p244 = scmp.ne.s32.totalorder %s229, %s243
      %p245 = scmp.eq.s32.totalorder %s30, 0
      %p246 = por %p244, %p245
      %s247 = ssub.s32 %s31, %s50
      %s248 = ssub.s32 %s32, %s46
      %s249 = sor.u32 %s247, %s248
      %p250 = scmp.eq.s32.totalorder %s249, 0
      %s252 = sadd.s32 %s251, 1
      %s253 = scalar_select %p250, %s251, %s252
      %p256 = pneg %p250
      %p257 = scmp.eq.s32.totalorder %s24, 1
      %p258 = por %p256, %p257
      %p259 = scmp.ne.s32.totalorder %s251, %s254
      %p260 = scmp.eq.s32.totalorder %s24, 0
      %p261 = por %p259, %p260
      %p262 = scmp.ne.s32.totalorder %s251, %s254
      %p263 = scmp.eq.s32.totalorder %s29, 1
      %p264 = por %p262, %p263
      %p265 = scmp.ne.s32.totalorder %s254, %s255
      %p266 = scmp.eq.s32.totalorder %s29, 0
      %p267 = por %p265, %p266
      %p268 = scmp.ne.s32.totalorder %s254, %s255
      %p269 = scmp.eq.s32.totalorder %s30, 1
      %p270 = por %p268, %p269
      %p272 = scmp.ne.s32.totalorder %s255, %s271
      %p273 = scmp.eq.s32.totalorder %s30, 0
      %p274 = por %p272, %p273
      %p275 = scmp.le.s32.totalorder 1, %s24
      %p276 = scmp.lt.s32.totalorder %s24, 3
      %p277 = pnand %p275, %p276
      %p278 = pneg %p277
      // Predicated region
      $region9: #{tpu_custom_call.1} parent=5 // pred_check
        _
      $region10: #{tpu_custom_call.1} parent=5 // pred_check_branch
        %280 = sbr.rel (%p277) target = $region12
      $region11: #{tpu_custom_call.1} parent=5 // pred_region
        %s281 = ssub.s32 %s24, 1
        // Predicated region
        $region13: #{tpu_custom_call.1} parent=11 // pred_check
          %p282 = pneg %p176
        $region14: #{tpu_custom_call.1} parent=11 // pred_check_branch
          %284 = sbr.rel (%p282) target = $region16
        $region15: #{tpu_custom_call.1} parent=11 // pred_region
          %s286 = ssub.s32 256, 256
          %287 = vsyncadd [#allocation12], %s286
          %s288 = sshll.u32 [#allocation11], 4
          %s289 = int_to_ptr.vmem [resolvable:$true] %s288
          %294 = dma.hbm_to_vmem [thread:$0]  %s4, 256, %s289, [#allocation12], 64, 64, 4
        $region16: #{tpu_custom_call.1} parent=11 // pred_fallthru
          _
        // Predicated region
        $region17: #{tpu_custom_call.1} parent=11 // pred_check
          %p295 = pneg %p197
        $region18: #{tpu_custom_call.1} parent=11 // pred_check_branch
          %297 = sbr.rel (%p295) target = $region20
        $region19: #{tpu_custom_call.1} parent=11 // pred_region
          _
        $region20: #{tpu_custom_call.1} parent=11 // pred_fallthru
          _
        // Predicated region
        $region21: #{tpu_custom_call.1} parent=11 // pred_check
          %p298 = pneg %p218
        $region22: #{tpu_custom_call.1} parent=11 // pred_check_branch
          %300 = sbr.rel (%p298) target = $region24
        $region23: #{tpu_custom_call.1} parent=11 // pred_region
          _
        $region24: #{tpu_custom_call.1} parent=11 // pred_fallthru
          _
        // Predicated region
        $region25: #{tpu_custom_call.1} parent=11 // pred_check
          %p301 = pneg %p239
        $region26: #{tpu_custom_call.1} parent=11 // pred_check_branch
          %303 = sbr.rel (%p301) target = $region28
        $region27: #{tpu_custom_call.1} parent=11 // pred_region
          _
        $region28: #{tpu_custom_call.1} parent=11 // pred_fallthru
          _
      $region12: #{tpu_custom_call.1} parent=5 // pred_fallthru
        _
      %p304 = scmp.lt.s32.totalorder %s24, 2
      // Predicated region
      $region29: #{tpu_custom_call.1} parent=5 // pred_check
        %p305 = pneg %p304
      $region30: #{tpu_custom_call.1} parent=5 // pred_check_branch
        %307 = sbr.rel (%p305) target = $region32
      $region31: #{tpu_custom_call.1} parent=5 // pred_region
        // Predicated region
        $region33: #{tpu_custom_call.1} parent=31 // pred_check
          %p308 = pneg %p65
        $region34: #{tpu_custom_call.1} parent=31 // pred_check_branch
          %310 = sbr.rel (%p308) target = $region36
        $region35: #{tpu_custom_call.1} parent=31 // pred_region
          %s311 = sand.u32 %s55, 1
          %s312 = scalar_lea.sflag [#allocation6], %s311
          %s313 = sand.u32 %s55, 1
          %s314 = smul.addr %s313, 8
          %s315 = scalar_lea.vmem [#allocation5], %s314
          %s316 = smul.u32 2, %s32
          %s318 = ssub.s32 128, 128
          %319 = vsyncadd %s312, %s318
          %s320 = smul.addr %s31, 2
          %s321 = sadd.s32 %s316, %s320
          %s322 = smul.addr %s321, 64
          %s323 = scalar_lea.hbm %s0, %s322
          %s324 = sshll.u32 %s315, 4
          %s325 = int_to_ptr.vmem [resolvable:$true] %s324
          %330 = dma.hbm_to_vmem [thread:$0]  %s323, 128, %s325, %s312, 64, 64, 4
        $region36: #{tpu_custom_call.1} parent=31 // pred_fallthru
          _
        // Predicated region
        $region37: #{tpu_custom_call.1} parent=31 // pred_check
          %p331 = pneg %p93
        $region38: #{tpu_custom_call.1} parent=31 // pred_check_branch
          %333 = sbr.rel (%p331) target = $region40
        $region39: #{tpu_custom_call.1} parent=31 // pred_region
          %s334 = sand.u32 %s24, 1
          %s335 = scalar_lea.sflag [#allocation9], %s334
          %s336 = sand.u32 %s83, 1
          %s337 = smul.addr %s336, 8
          %s338 = scalar_lea.vmem [#allocation8], %s337
          %s339 = smul.u32 2, %s33
          %s341 = ssub.s32 128, 128
          %342 = vsyncadd %s335, %s341
          %s343 = smul.addr %s31, 2
          %s344 = sadd.s32 %s339, %s343
          %s345 = smul.addr %s344, 64
          %s346 = scalar_lea.hbm %s1, %s345
          %s347 = sshll.u32 %s338, 4
          %s348 = int_to_ptr.vmem [resolvable:$true] %s347
          %353 = dma.hbm_to_vmem [thread:$0]  %s346, 128, %s348, %s335, 64, 64, 4
        $region40: #{tpu_custom_call.1} parent=31 // pred_fallthru
          _
        // Predicated region
        $region41: #{tpu_custom_call.1} parent=31 // pred_check
          %p354 = pneg %p121
        $region42: #{tpu_custom_call.1} parent=31 // pred_check_branch
          %356 = sbr.rel (%p354) target = $region44
        $region43: #{tpu_custom_call.1} parent=31 // pred_region
          %p357 = scmp.lt.s32.totalorder %s31, 1
          %s358 = scalar_select %p357, %s31, 1
          %p359 = scmp.lt.s32.totalorder %s33, 0
          %s360 = scalar_select %p359, %s33, 0
          %s361 = sadd.s32 %s360, %s358
          %s362 = scalar_lea.vmem %s2, %s361
        $region44: #{tpu_custom_call.1} parent=31 // pred_fallthru
          _
        // Predicated region
        $region45: #{tpu_custom_call.1} parent=31 // pred_check
          %p363 = pneg %p149
        $region46: #{tpu_custom_call.1} parent=31 // pred_check_branch
          %365 = sbr.rel (%p363) target = $region48
        $region47: #{tpu_custom_call.1} parent=31 // pred_region
          %s366 = sand.u32 %s24, 1
          %s367 = scalar_lea.sflag [#allocation9], %s366
          %s368 = sand.u32 %s139, 1
          %s369 = smul.addr %s368, 8
          %s370 = scalar_lea.vmem [#allocation10], %s369
          %s371 = smul.u32 2, %s32
          %s373 = ssub.s32 128, 128
          %374 = vsyncadd %s367, %s373
          %s375 = smul.addr %s31, 2
          %s376 = sadd.s32 %s371, %s375
          %s377 = smul.addr %s376, 64
          %s378 = scalar_lea.hbm %s3, %s377
          %s379 = sshll.u32 %s370, 4
          %s380 = int_to_ptr.vmem [resolvable:$true] %s379
          %385 = dma.hbm_to_vmem [thread:$0]  %s378, 128, %s380, %s367, 64, 64, 4
        $region48: #{tpu_custom_call.1} parent=31 // pred_fallthru
          _
      $region32: #{tpu_custom_call.1} parent=5 // pred_fallthru
        _
      %p386 = scmp.le.s32.totalorder 1, %s24
      %p387 = scmp.lt.s32.totalorder %s24, 3
      %p388 = pnand %p386, %p387
      %p389 = pneg %p388
      // Predicated region
      $region49: #{tpu_custom_call.1} parent=5 // pred_check
        _
      $region50: #{tpu_custom_call.1} parent=5 // pred_check_branch
        %391 = sbr.rel (%p388) target = $region52
      $region51: #{tpu_custom_call.1} parent=5 // pred_region
        %s392 = ssub.s32 %s24, 1
        %s393 = sand.u32 %s58, 1
        %s394 = scalar_lea.sflag [#allocation6], %s393
        %s395 = sand.u32 %s58, 1
        %s396 = smul.addr %s395, 8
        %s397 = scalar_lea.vmem [#allocation5], %s396
        // Predicated region
        $region53: #{tpu_custom_call.1} parent=51 // pred_check
          %p398 = pneg %p71
        $region54: #{tpu_custom_call.1} parent=51 // pred_check_branch
          %400 = sbr.rel (%p398) target = $region56
        $region55: #{tpu_custom_call.1} parent=51 // pred_region
          %401 = dma.done %s394, 128
        $region56: #{tpu_custom_call.1} parent=51 // pred_fallthru
          _
        %s402 = sand.u32 %s29, 1
        %s403 = scalar_lea.sflag [#allocation9], %s402
        %s404 = sand.u32 %s86, 1
        %s405 = smul.addr %s404, 8
        %s406 = scalar_lea.vmem [#allocation8], %s405
        // Predicated region
        $region57: #{tpu_custom_call.1} parent=51 // pred_check
          %p407 = pneg %p99
        $region58: #{tpu_custom_call.1} parent=51 // pred_check_branch
          %409 = sbr.rel (%p407) target = $region60
        $region59: #{tpu_custom_call.1} parent=51 // pred_region
          %410 = dma.done %s403, 128
        $region60: #{tpu_custom_call.1} parent=51 // pred_fallthru
          _
        %s411 = sand.u32 %s29, 1
        %s412 = scalar_lea.sflag [#allocation9], %s411
        %s413 = sand.u32 %s142, 1
        %s414 = smul.addr %s413, 8
        %s415 = scalar_lea.vmem [#allocation10], %s414
        // Predicated region
        $region61: #{tpu_custom_call.1} parent=51 // pred_check
          %p416 = pneg %p155
        $region62: #{tpu_custom_call.1} parent=51 // pred_check_branch
          %418 = sbr.rel (%p416) target = $region64
        $region63: #{tpu_custom_call.1} parent=51 // pred_region
          %419 = dma.done %s412, 128
        $region64: #{tpu_custom_call.1} parent=51 // pred_fallthru
          _
        // Predicated region
        $region65: #{tpu_custom_call.1} parent=51 // pred_check
          %p420 = pneg %p176
        $region66: #{tpu_custom_call.1} parent=51 // pred_check_branch
          %422 = sbr.rel (%p420) target = $region68
        $region67: #{tpu_custom_call.1} parent=51 // pred_region
          %423 = dma.done [#allocation12], 256
        $region68: #{tpu_custom_call.1} parent=51 // pred_fallthru
          _
        %s424 = sand.u32 %s58, 1
        %s425 = scalar_lea.sflag [#allocation6], %s424
        %s426 = sand.u32 %s58, 1
        %s427 = smul.addr %s426, 8
        %s428 = scalar_lea.vmem [#allocation5], %s427
        %p429 = pneg %p71
        %p430 = pneg %p68
        %s431 = sand.u32 %s29, 1
        %s432 = scalar_lea.sflag [#allocation9], %s431
        %s433 = sand.u32 %s86, 1
        %s434 = smul.addr %s433, 8
        %s435 = scalar_lea.vmem [#allocation8], %s434
        %p436 = pneg %p99
        %p437 = pneg %p96
        %p438 = scmp.lt.s32.totalorder %s34, 1
        %s439 = scalar_select %p438, %s34, 1
        %p440 = scmp.lt.s32.totalorder %s36, 0
        %s441 = scalar_select %p440, %s36, 0
        %s442 = sadd.s32 %s441, %s439
        %s443 = scalar_lea.vmem %s2, %s442
        %p444 = pneg %p127
        %p445 = pneg %p124
        %s446 = sand.u32 %s29, 1
        %s447 = scalar_lea.sflag [#allocation9], %s446
        %s448 = sand.u32 %s142, 1
        %s449 = smul.addr %s448, 8
        %s450 = scalar_lea.vmem [#allocation10], %s449
        %p451 = pneg %p155
        %p452 = pneg %p152
        %p453 = pneg %p176
        %p454 = pneg %p173
        %p455 = pneg %p197
        %p456 = pneg %p194
        %p457 = pneg %p218
        %p458 = pneg %p215
        %p459 = pneg %p239
        %p460 = pneg %p236
        %p461 = pneg %p267
        %p462 = pneg %p264
        %s463 = sand.u32 %s254, 1
        %s464 = scalar_lea.sflag [#allocation7], %s463
        %s465 = sand.u32 %s254, 1
        %s466 = smul.addr %s465, 16
        %s467 = scalar_lea.vmem [#allocation13], %s466
        %s468 = smul.u32 2, %s35
        %s469 = smul.u32 2, %s36
        %p470 = scmp.lt.s32.totalorder %s34, 1
        %s471 = scalar_select %p470, %s34, 1
        %p472 = scmp.lt.s32.totalorder %s36, 0
        %s473 = scalar_select %p472, %s36, 0
        %s474 = sadd.s32 %s473, %s471
        %s475 = scalar_lea.vmem %s2, %s474
        %s476 = smul.u32 2, %s35
        %s477 = smul.u32 2, %s35
        %p479 = scmp.eq.s32.totalorder %s36, 0
        // Predicated region
        $region69: #{tpu_custom_call.1} parent=51 // pred_check
          %p480 = pneg %p479
        $region70: #{tpu_custom_call.1} parent=51 // pred_check_branch
          %482 = sbr.rel (%p480) target = $region72
        $region71: #{tpu_custom_call.1} parent=51 // pred_region
          %vm483 = vcmask 261120
          %484 = vst.msk [vmem:[#allocation2] sm:$0xff] %vm483, 0.0
          %485 = vst.msk [vmem:[#allocation2 + $0x8] sm:$0xff] %vm483, 0.0
          %vm486 = vcmask 31744
          %487 = vst.msk [vmem:[#allocation3] sm:$0xff] %vm486, -1e+30
          %488 = vst.msk [vmem:[#allocation3 + $0x8] sm:$0xff] %vm486, -1e+30
          %489 = vst.msk [vmem:[#allocation4] sm:$0xff] %vm486, 0.0
          %490 = vst.msk [vmem:[#allocation4 + $0x8] sm:$0xff] %vm486, 0.0
        $region72: #{tpu_custom_call.1} parent=51 // pred_fallthru
          _
        %v491 = vld [vmem:[%s397] sm:$0xf]
        %v492 = vld [vmem:[%s397 + $0x4] sm:$0xf]
        %v493 = vld [vmem:[%s406] sm:$0xf]
        %v494 = vld [vmem:[%s406 + $0x4] sm:$0xf]
        %v495 = vld [vmem:[%s475] sm:$0x1]
        %v496 = vld [vmem:[#allocation3] sm:$0xff]
        %v497 = vld [vmem:[#allocation3 + $0x8] sm:$0xff]
        %v498 = vld [vmem:[#allocation4] sm:$0xff]
        %v499 = vld [vmem:[#allocation4 + $0x8] sm:$0xff]
        %v501 = vlaneseq
        %v502 = vshrl.u32 %v501, 7
        %v503 = vsub.s32 0, %v502
        %v504 = vrot.slane %v495, %v503
        %v508 = vunpack.c.l.b16 %v491
        %v509 = vunpack.c.l.b16 %v492
        %v510 = vpack.c.b16 %v509, %v508
        %v513 = vunpack.c.l.b16 %v493
        %v514 = vunpack.c.l.b16 %v494
        %v515 = vpack.c.b16 %v514, %v513
        %vm516 = vcmask 64512
        %v518 = vsel %vm516, %v510, 0
        %v521 = vsel %vm516, %v515, 0
        %523 = vmatprep.subr.bf16.mxu0 0
        %524 = vmatpush1.bf16.xpose.msra.mxu0 %v521
        %525 = vmatprep.subr.bf16.mxu0 0
        %526 = vmatpush1.bf16.xpose.msra.mxu0 0
        %527 = vmatprep.subr.bf16.mxu0 0
        %528 = vmatpush1.bf16.xpose.msra.mxu0 0
        %529 = vmatprep.subr.bf16.mxu0 0
        %530 = vmatpush1.bf16.xpose.msra.mxu0 0
        %531 = vmatprep.subr.bf16.mxu0 0
        %532 = vmatpush1.bf16.xpose.msra.mxu0 0
        %533 = vmatprep.subr.bf16.mxu0 0
        %534 = vmatpush1.bf16.xpose.msra.mxu0 0
        %535 = vmatprep.subr.bf16.mxu0 0
        %536 = vmatpush1.bf16.xpose.msra.mxu0 0
        %537 = vmatprep.subr.bf16.mxu0 0
        %538 = vmatpush1.bf16.xpose.msra.mxu0 0
        %539 = vmatprep.subr.bf16.mxu0 0
        %540 = vmatpush1.bf16.xpose.msra.mxu0 0
        %541 = vmatprep.subr.bf16.mxu0 0
        %542 = vmatpush1.bf16.xpose.msra.mxu0 0
        %543 = vmatprep.subr.bf16.mxu0 0
        %544 = vmatpush1.bf16.xpose.msra.mxu0 0
        %545 = vmatprep.subr.bf16.mxu0 0
        %546 = vmatpush1.bf16.xpose.msra.mxu0 0
        %547 = vmatprep.subr.bf16.mxu0 0
        %548 = vmatpush1.bf16.xpose.msra.mxu0 0
        %549 = vmatprep.subr.bf16.mxu0 0
        %550 = vmatpush1.bf16.xpose.msra.mxu0 0
        %551 = vmatprep.subr.bf16.mxu0 0
        %552 = vmatpush1.bf16.xpose.msra.mxu0 0
        %553 = vmatprep.subr.bf16.mxu0 0
        %554 = vmatpush1.bf16.xpose.msra.mxu0 0
        %555 = vmatprep.mubr.bf16.mxu0 0
        %556 = vmatmul.mubr.bf16.gmra.mrb[0].mxu0 %v518
        %v557 = vpop.f32.mrb[0].mxu0
        %v558 = vadd.f32 %v504, %v557
        %v559 = vpop.f32.mrb[0].mxu0
        %v560 = vpop.f32.mrb[0].mxu0
        %v561 = vadd.f32 %v504, %v560
        %v562 = vpop.f32.mrb[0].mxu0
        %563 = vdwg.mxu0
        %vm564 = vcmask 130048
        %v565 = vsel %vm564, %v558, -inf
        %566 = vmax.xlane.f32.xlu0 %v565
        %v567 = vpop.xlane.xlu0 %566
        %v568 = vsel %vm564, %v561, -inf
        %569 = vmax.xlane.f32.xlu0 %v568
        %v570 = vpop.xlane.xlu0 %569
        %v571 = vmax.f32 %v496, %v567
        %v572 = vmax.f32 %v497, %v570
        %v573 = vsub.f32 %v496, %v571
        %v574 = vsub.f32 %v497, %v572
        %v575 = vmul.f32 %v573, 1.442695
        %v576 = vpow.pop %v575
        %v577 = vmul.f32 %v574, 1.442695
        %v578 = vpow.pop %v577
        %580 = vset.pattern.permute.xlu0 0
        %581 = vperm.xlu0 %580, %v571
        %v582 = vpop.permute.xlu0 %581
        %585 = vset.pattern.permute.xlu0 0
        %586 = vperm.xlu0 %585, %v572
        %v587 = vpop.permute.xlu0 %586
        %v589 = vsub.f32 %v558, %v582
        %v590 = vsub.f32 %v561, %v587
        %v591 = vpack.c.bf16 %v590, %v589
        %v593 = vmul.bf16 %v591, 1069105081
        %v594 = vpow.bf16.pop %v593
        %v595 = vmul.f32 %v576, %v498
        %v596 = vmul.f32 %v578, %v499
        %v597 = vunpack.c.l.bf16 %v594
        %v598 = vunpack.c.h.bf16 %v594
        %v599 = vsel %vm564, %v597, 0.0
        %600 = vadd.xlane.f32.xlu0 %v599
        %v601 = vpop.xlane.xlu0 %600
        %v602 = vsel %vm564, %v598, 0.0
        %603 = vadd.xlane.f32.xlu0 %v602
        %v604 = vpop.xlane.xlu0 %603
        %v605 = vadd.f32 %v595, %v601
        %v606 = vadd.f32 %v596, %v604
        %607 = vrot.lane.b32.xlu0 %v515, 96
        %v608 = vpop.permute.xlu0 %607
        %v611 = vsel %vm564, %v594, 0
        %613 = vmatprep.subr.bf16.mxu0 0
        %614 = vmatpush1.bf16.msra.mxu0 %v608
        %615 = vmatprep.subr.bf16.mxu0 0
        %616 = vmatpush1.bf16.msra.mxu0 0
        %617 = vmatprep.subr.bf16.mxu0 0
        %618 = vmatpush1.bf16.msra.mxu0 0
        %619 = vmatprep.subr.bf16.mxu0 0
        %620 = vmatpush1.bf16.msra.mxu0 0
        %621 = vmatprep.subr.bf16.mxu0 0
        %622 = vmatpush1.bf16.msra.mxu0 0
        %623 = vmatprep.subr.bf16.mxu0 0
        %624 = vmatpush1.bf16.msra.mxu0 0
        %625 = vmatprep.subr.bf16.mxu0 0
        %626 = vmatpush1.bf16.msra.mxu0 0
        %627 = vmatprep.subr.bf16.mxu0 0
        %628 = vmatpush1.bf16.msra.mxu0 0
        %629 = vmatprep.subr.bf16.mxu0 0
        %630 = vmatpush1.bf16.msra.mxu0 0
        %631 = vmatprep.subr.bf16.mxu0 0
        %632 = vmatpush1.bf16.msra.mxu0 0
        %633 = vmatprep.subr.bf16.mxu0 0
        %634 = vmatpush1.bf16.msra.mxu0 0
        %635 = vmatprep.subr.bf16.mxu0 0
        %636 = vmatpush1.bf16.msra.mxu0 0
        %637 = vmatprep.subr.bf16.mxu0 0
        %638 = vmatpush1.bf16.msra.mxu0 0
        %639 = vmatprep.subr.bf16.mxu0 0
        %640 = vmatpush1.bf16.msra.mxu0 0
        %641 = vmatprep.subr.bf16.mxu0 0
        %642 = vmatpush1.bf16.msra.mxu0 0
        %643 = vmatprep.subr.bf16.mxu0 0
        %644 = vmatpush1.bf16.msra.mxu0 0
        %645 = vmatprep.mubr.bf16.mxu0 0
        %646 = vmatmul.mubr.bf16.gmra.mrb[0].mxu0 %v611
        %v647 = vpop.f32.mrb[0].mxu0
        %v648 = vadd.f32 0.0, %v647
        %v649 = vpop.f32.mrb[0].mxu0
        %v650 = vpop.f32.mrb[0].mxu0
        %v651 = vadd.f32 0.0, %v650
        %v652 = vpop.f32.mrb[0].mxu0
        %653 = vdwg.mxu0
        %654 = vrot.lane.b32.xlu0 %v510, 120
        %v655 = vpop.permute.xlu0 %654
        %656 = vrot.lane.b32.xlu0 %v515, 120
        %v657 = vpop.permute.xlu0 %656
        %v659 = vsel %vm516, %v655, 0
        %v662 = vsel %vm516, %v657, 0
        %664 = vmatprep.subr.bf16.mxu0 0
        %665 = vmatpush1.bf16.xpose.msra.mxu0 %v662
        %666 = vmatprep.subr.bf16.mxu0 0
        %667 = vmatpush1.bf16.xpose.msra.mxu0 0
        %668 = vmatprep.subr.bf16.mxu0 0
        %669 = vmatpush1.bf16.xpose.msra.mxu0 0
        %670 = vmatprep.subr.bf16.mxu0 0
        %671 = vmatpush1.bf16.xpose.msra.mxu0 0
        %672 = vmatprep.subr.bf16.mxu0 0
        %673 = vmatpush1.bf16.xpose.msra.mxu0 0
        %674 = vmatprep.subr.bf16.mxu0 0
        %675 = vmatpush1.bf16.xpose.msra.mxu0 0
        %676 = vmatprep.subr.bf16.mxu0 0
        %677 = vmatpush1.bf16.xpose.msra.mxu0 0
        %678 = vmatprep.subr.bf16.mxu0 0
        %679 = vmatpush1.bf16.xpose.msra.mxu0 0
        %680 = vmatprep.subr.bf16.mxu0 0
        %681 = vmatpush1.bf16.xpose.msra.mxu0 0
        %682 = vmatprep.subr.bf16.mxu0 0
        %683 = vmatpush1.bf16.xpose.msra.mxu0 0
        %684 = vmatprep.subr.bf16.mxu0 0
        %685 = vmatpush1.bf16.xpose.msra.mxu0 0
        %686 = vmatprep.subr.bf16.mxu0 0
        %687 = vmatpush1.bf16.xpose.msra.mxu0 0
        %688 = vmatprep.subr.bf16.mxu0 0
        %689 = vmatpush1.bf16.xpose.msra.mxu0 0
        %690 = vmatprep.subr.bf16.mxu0 0
        %691 = vmatpush1.bf16.xpose.msra.mxu0 0
        %692 = vmatprep.subr.bf16.mxu0 0
        %693 = vmatpush1.bf16.xpose.msra.mxu0 0
        %694 = vmatprep.subr.bf16.mxu0 0
        %695 = vmatpush1.bf16.xpose.msra.mxu0 0
        %696 = vmatprep.mubr.bf16.mxu0 0
        %697 = vmatmul.mubr.bf16.gmra.mrb[0].mxu0 %v659
        %v698 = vpop.f32.mrb[0].mxu0
        %v699 = vadd.f32 %v504, %v698
        %v700 = vpop.f32.mrb[0].mxu0
        %v701 = vpop.f32.mrb[0].mxu0
        %v702 = vadd.f32 %v504, %v701
        %v703 = vpop.f32.mrb[0].mxu0
        %704 = vdwg.mxu0
        %v705 = vsel %vm564, %v699, -inf
        %706 = vmax.xlane.f32.xlu0 %v705
        %v707 = vpop.xlane.xlu0 %706
        %v708 = vsel %vm564, %v702, -inf
        %709 = vmax.xlane.f32.xlu0 %v708
        %v710 = vpop.xlane.xlu0 %709
        %v711 = vmax.f32 %v496, %v707
        %v712 = vmax.f32 %v497, %v710
        %v713 = vsub.f32 %v496, %v711
        %v714 = vsub.f32 %v497, %v712
        %v715 = vmul.f32 %v713, 1.442695
        %v716 = vpow.pop %v715
        %v717 = vmul.f32 %v714, 1.442695
        %v718 = vpow.pop %v717
        %720 = vset.pattern.permute.xlu0 1
        %721 = vperm.xlu0 %720, %v711
        %v722 = vpop.permute.xlu0 %721
        %725 = vset.pattern.permute.xlu0 1
        %726 = vperm.xlu0 %725, %v712
        %v727 = vpop.permute.xlu0 %726
        %v729 = vsub.f32 %v699, %v722
        %v730 = vsub.f32 %v702, %v727
        %v731 = vpack.c.bf16 %v730, %v729
        %v733 = vmul.bf16 %v731, 1069105081
        %v734 = vpow.bf16.pop %v733
        %v735 = vmul.f32 %v716, %v498
        %v736 = vmul.f32 %v718, %v499
        %v737 = vunpack.c.l.bf16 %v734
        %v738 = vunpack.c.h.bf16 %v734
        %v739 = vsel %vm564, %v737, 0.0
        %740 = vadd.xlane.f32.xlu0 %v739
        %v741 = vpop.xlane.xlu0 %740
        %v742 = vsel %vm564, %v738, 0.0
        %743 = vadd.xlane.f32.xlu0 %v742
        %v744 = vpop.xlane.xlu0 %743
        %v745 = vadd.f32 %v735, %v741
        %v746 = vadd.f32 %v736, %v744
        %747 = vrot.lane.b32.xlu0 %v515, 88
        %v748 = vpop.permute.xlu0 %747
        %v751 = vsel %vm564, %v734, 0
        %753 = vmatprep.subr.bf16.mxu0 0
        %754 = vmatpush1.bf16.msra.mxu0 %v748
        %755 = vmatprep.subr.bf16.mxu0 0
        %756 = vmatpush1.bf16.msra.mxu0 0
        %757 = vmatprep.subr.bf16.mxu0 0
        %758 = vmatpush1.bf16.msra.mxu0 0
        %759 = vmatprep.subr.bf16.mxu0 0
        %760 = vmatpush1.bf16.msra.mxu0 0
        %761 = vmatprep.subr.bf16.mxu0 0
        %762 = vmatpush1.bf16.msra.mxu0 0
        %763 = vmatprep.subr.bf16.mxu0 0
        %764 = vmatpush1.bf16.msra.mxu0 0
        %765 = vmatprep.subr.bf16.mxu0 0
        %766 = vmatpush1.bf16.msra.mxu0 0
        %767 = vmatprep.subr.bf16.mxu0 0
        %768 = vmatpush1.bf16.msra.mxu0 0
        %769 = vmatprep.subr.bf16.mxu0 0
        %770 = vmatpush1.bf16.msra.mxu0 0
        %771 = vmatprep.subr.bf16.mxu0 0
        %772 = vmatpush1.bf16.msra.mxu0 0
        %773 = vmatprep.subr.bf16.mxu0 0
        %774 = vmatpush1.bf16.msra.mxu0 0
        %775 = vmatprep.subr.bf16.mxu0 0
        %776 = vmatpush1.bf16.msra.mxu0 0
        %777 = vmatprep.subr.bf16.mxu0 0
        %778 = vmatpush1.bf16.msra.mxu0 0
        %779 = vmatprep.subr.bf16.mxu0 0
        %780 = vmatpush1.bf16.msra.mxu0 0
        %781 = vmatprep.subr.bf16.mxu0 0
        %782 = vmatpush1.bf16.msra.mxu0 0
        %783 = vmatprep.subr.bf16.mxu0 0
        %784 = vmatpush1.bf16.msra.mxu0 0
        %785 = vmatprep.mubr.bf16.mxu0 0
        %786 = vmatmul.mubr.bf16.gmra.mrb[0].mxu0 %v751
        %v787 = vpop.f32.mrb[0].mxu0
        %v788 = vadd.f32 0.0, %v787
        %v789 = vpop.f32.mrb[0].mxu0
        %v790 = vpop.f32.mrb[0].mxu0
        %v791 = vadd.f32 0.0, %v790
        %v792 = vpop.f32.mrb[0].mxu0
        %793 = vdwg.mxu0
        %794 = vrot.lane.b32.xlu0 %v510, 112
        %v795 = vpop.permute.xlu0 %794
        %796 = vrot.lane.b32.xlu0 %v515, 112
        %v797 = vpop.permute.xlu0 %796
        %v799 = vsel %vm516, %v795, 0
        %v802 = vsel %vm516, %v797, 0
        %804 = vmatprep.subr.bf16.mxu0 0
        %805 = vmatpush1.bf16.xpose.msra.mxu0 %v802
        %806 = vmatprep.subr.bf16.mxu0 0
        %807 = vmatpush1.bf16.xpose.msra.mxu0 0
        %808 = vmatprep.subr.bf16.mxu0 0
        %809 = vmatpush1.bf16.xpose.msra.mxu0 0
        %810 = vmatprep.subr.bf16.mxu0 0
        %811 = vmatpush1.bf16.xpose.msra.mxu0 0
        %812 = vmatprep.subr.bf16.mxu0 0
        %813 = vmatpush1.bf16.xpose.msra.mxu0 0
        %814 = vmatprep.subr.bf16.mxu0 0
        %815 = vmatpush1.bf16.xpose.msra.mxu0 0
        %816 = vmatprep.subr.bf16.mxu0 0
        %817 = vmatpush1.bf16.xpose.msra.mxu0 0
        %818 = vmatprep.subr.bf16.mxu0 0
        %819 = vmatpush1.bf16.xpose.msra.mxu0 0
        %820 = vmatprep.subr.bf16.mxu0 0
        %821 = vmatpush1.bf16.xpose.msra.mxu0 0
        %822 = vmatprep.subr.bf16.mxu0 0
        %823 = vmatpush1.bf16.xpose.msra.mxu0 0
        %824 = vmatprep.subr.bf16.mxu0 0
        %825 = vmatpush1.bf16.xpose.msra.mxu0 0
        %826 = vmatprep.subr.bf16.mxu0 0
        %827 = vmatpush1.bf16.xpose.msra.mxu0 0
        %828 = vmatprep.subr.bf16.mxu0 0
        %829 = vmatpush1.bf16.xpose.msra.mxu0 0
        %830 = vmatprep.subr.bf16.mxu0 0
        %831 = vmatpush1.bf16.xpose.msra.mxu0 0
        %832 = vmatprep.subr.bf16.mxu0 0
        %833 = vmatpush1.bf16.xpose.msra.mxu0 0
        %834 = vmatprep.subr.bf16.mxu0 0
        %835 = vmatpush1.bf16.xpose.msra.mxu0 0
        %836 = vmatprep.mubr.bf16.mxu0 0
        %837 = vmatmul.mubr.bf16.gmra.mrb[0].mxu0 %v799
        %v838 = vpop.f32.mrb[0].mxu0
        %v839 = vadd.f32 %v504, %v838
        %v840 = vpop.f32.mrb[0].mxu0
        %v841 = vpop.f32.mrb[0].mxu0
        %v842 = vadd.f32 %v504, %v841
        %v843 = vpop.f32.mrb[0].mxu0
        %844 = vdwg.mxu0
        %v845 = vsel %vm564, %v839, -inf
        %846 = vmax.xlane.f32.xlu0 %v845
        %v847 = vpop.xlane.xlu0 %846
        %v848 = vsel %vm564, %v842, -inf
        %849 = vmax.xlane.f32.xlu0 %v848
        %v850 = vpop.xlane.xlu0 %849
        %v851 = vmax.f32 %v496, %v847
        %v852 = vmax.f32 %v497, %v850
        %v853 = vsub.f32 %v496, %v851
        %v854 = vsub.f32 %v497, %v852
        %v855 = vmul.f32 %v853, 1.442695
        %v856 = vpow.pop %v855
        %v857 = vmul.f32 %v854, 1.442695
        %v858 = vpow.pop %v857
        %860 = vset.pattern.permute.xlu0 2
        %861 = vperm.xlu0 %860, %v851
        %v862 = vpop.permute.xlu0 %861
        %865 = vset.pattern.permute.xlu0 2
        %866 = vperm.xlu0 %865, %v852
        %v867 = vpop.permute.xlu0 %866
        %v869 = vsub.f32 %v839, %v862
        %v870 = vsub.f32 %v842, %v867
        %v871 = vpack.c.bf16 %v870, %v869
        %v873 = vmul.bf16 %v871, 1069105081
        %v874 = vpow.bf16.pop %v873
        %v875 = vmul.f32 %v856, %v498
        %v876 = vmul.f32 %v858, %v499
        %v877 = vunpack.c.l.bf16 %v874
        %v878 = vunpack.c.h.bf16 %v874
        %v879 = vsel %vm564, %v877, 0.0
        %880 = vadd.xlane.f32.xlu0 %v879
        %v881 = vpop.xlane.xlu0 %880
        %v882 = vsel %vm564, %v878, 0.0
        %883 = vadd.xlane.f32.xlu0 %v882
        %v884 = vpop.xlane.xlu0 %883
        %v885 = vadd.f32 %v875, %v881
        %v886 = vadd.f32 %v876, %v884
        %887 = vrot.lane.b32.xlu0 %v515, 80
        %v888 = vpop.permute.xlu0 %887
        %v891 = vsel %vm564, %v874, 0
        %893 = vmatprep.subr.bf16.mxu0 0
        %894 = vmatpush1.bf16.msra.mxu0 %v888
        %895 = vmatprep.subr.bf16.mxu0 0
        %896 = vmatpush1.bf16.msra.mxu0 0
        %897 = vmatprep.subr.bf16.mxu0 0
        %898 = vmatpush1.bf16.msra.mxu0 0
        %899 = vmatprep.subr.bf16.mxu0 0
        %900 = vmatpush1.bf16.msra.mxu0 0
        %901 = vmatprep.subr.bf16.mxu0 0
        %902 = vmatpush1.bf16.msra.mxu0 0
        %903 = vmatprep.subr.bf16.mxu0 0
        %904 = vmatpush1.bf16.msra.mxu0 0
        %905 = vmatprep.subr.bf16.mxu0 0
        %906 = vmatpush1.bf16.msra.mxu0 0
        %907 = vmatprep.subr.bf16.mxu0 0
        %908 = vmatpush1.bf16.msra.mxu0 0
        %909 = vmatprep.subr.bf16.mxu0 0
        %910 = vmatpush1.bf16.msra.mxu0 0
        %911 = vmatprep.subr.bf16.mxu0 0
        %912 = vmatpush1.bf16.msra.mxu0 0
        %913 = vmatprep.subr.bf16.mxu0 0
        %914 = vmatpush1.bf16.msra.mxu0 0
        %915 = vmatprep.subr.bf16.mxu0 0
        %916 = vmatpush1.bf16.msra.mxu0 0
        %917 = vmatprep.subr.bf16.mxu0 0
        %918 = vmatpush1.bf16.msra.mxu0 0
        %919 = vmatprep.subr.bf16.mxu0 0
        %920 = vmatpush1.bf16.msra.mxu0 0
        %921 = vmatprep.subr.bf16.mxu0 0
        %922 = vmatpush1.bf16.msra.mxu0 0
        %923 = vmatprep.subr.bf16.mxu0 0
        %924 = vmatpush1.bf16.msra.mxu0 0
        %925 = vmatprep.mubr.bf16.mxu0 0
        %926 = vmatmul.mubr.bf16.gmra.mrb[0].mxu0 %v891
        %v927 = vpop.f32.mrb[0].mxu0
        %v928 = vadd.f32 0.0, %v927
        %v929 = vpop.f32.mrb[0].mxu0
        %v930 = vpop.f32.mrb[0].mxu0
        %v931 = vadd.f32 0.0, %v930
        %v932 = vpop.f32.mrb[0].mxu0
        %933 = vdwg.mxu0
        %934 = vrot.lane.b32.xlu0 %v510, 104
        %v935 = vpop.permute.xlu0 %934
        %936 = vrot.lane.b32.xlu0 %v515, 104
        %v937 = vpop.permute.xlu0 %936
        %v939 = vsel %vm516, %v935, 0
        %v942 = vsel %vm516, %v937, 0
        %944 = vmatprep.subr.bf16.mxu0 0
        %945 = vmatpush1.bf16.xpose.msra.mxu0 %v942
        %946 = vmatprep.subr.bf16.mxu0 0
        %947 = vmatpush1.bf16.xpose.msra.mxu0 0
        %948 = vmatprep.subr.bf16.mxu0 0
        %949 = vmatpush1.bf16.xpose.msra.mxu0 0
        %950 = vmatprep.subr.bf16.mxu0 0
        %951 = vmatpush1.bf16.xpose.msra.mxu0 0
        %952 = vmatprep.subr.bf16.mxu0 0
        %953 = vmatpush1.bf16.xpose.msra.mxu0 0
        %954 = vmatprep.subr.bf16.mxu0 0
        %955 = vmatpush1.bf16.xpose.msra.mxu0 0
        %956 = vmatprep.subr.bf16.mxu0 0
        %957 = vmatpush1.bf16.xpose.msra.mxu0 0
        %958 = vmatprep.subr.bf16.mxu0 0
        %959 = vmatpush1.bf16.xpose.msra.mxu0 0
        %960 = vmatprep.subr.bf16.mxu0 0
        %961 = vmatpush1.bf16.xpose.msra.mxu0 0
        %962 = vmatprep.subr.bf16.mxu0 0
        %963 = vmatpush1.bf16.xpose.msra.mxu0 0
        %964 = vmatprep.subr.bf16.mxu0 0
        %965 = vmatpush1.bf16.xpose.msra.mxu0 0
        %966 = vmatprep.subr.bf16.mxu0 0
        %967 = vmatpush1.bf16.xpose.msra.mxu0 0
        %968 = vmatprep.subr.bf16.mxu0 0
        %969 = vmatpush1.bf16.xpose.msra.mxu0 0
        %970 = vmatprep.subr.bf16.mxu0 0
        %971 = vmatpush1.bf16.xpose.msra.mxu0 0
        %972 = vmatprep.subr.bf16.mxu0 0
        %973 = vmatpush1.bf16.xpose.msra.mxu0 0
        %974 = vmatprep.subr.bf16.mxu0 0
        %975 = vmatpush1.bf16.xpose.msra.mxu0 0
        %976 = vmatprep.mubr.bf16.mxu0 0
        %977 = vmatmul.mubr.bf16.gmra.mrb[0].mxu0 %v939
        %v978 = vpop.f32.mrb[0].mxu0
        %v979 = vadd.f32 %v504, %v978
        %v980 = vpop.f32.mrb[0].mxu0
        %v981 = vpop.f32.mrb[0].mxu0
        %v982 = vadd.f32 %v504, %v981
        %v983 = vpop.f32.mrb[0].mxu0
        %984 = vdwg.mxu0
        %v985 = vsel %vm564, %v979, -inf
        %986 = vmax.xlane.f32.xlu0 %v985
        %v987 = vpop.xlane.xlu0 %986
        %v988 = vsel %vm564, %v982, -inf
        %989 = vmax.xlane.f32.xlu0 %v988
        %v990 = vpop.xlane.xlu0 %989
        %v991 = vmax.f32 %v496, %v987
        %v992 = vmax.f32 %v497, %v990
        %v993 = vsub.f32 %v496, %v991
        %v994 = vsub.f32 %v497, %v992
        %v995 = vmul.f32 %v993, 1.442695
        %v996 = vpow.pop %v995
        %v997 = vmul.f32 %v994, 1.442695
        %v998 = vpow.pop %v997
        %1000 = vset.pattern.permute.xlu0 3
        %1001 = vperm.xlu0 %1000, %v991
        %v1002 = vpop.permute.xlu0 %1001
        %1005 = vset.pattern.permute.xlu0 3
        %1006 = vperm.xlu0 %1005, %v992
        %v1007 = vpop.permute.xlu0 %1006
        %v1009 = vsub.f32 %v979, %v1002
        %v1010 = vsub.f32 %v982, %v1007
        %v1011 = vpack.c.bf16 %v1010, %v1009
        %v1013 = vmul.bf16 %v1011, 1069105081
        %v1014 = vpow.bf16.pop %v1013
        %v1015 = vmul.f32 %v996, %v498
        %v1016 = vmul.f32 %v998, %v499
        %v1017 = vunpack.c.l.bf16 %v1014
        %v1018 = vunpack.c.h.bf16 %v1014
        %v1019 = vsel %vm564, %v1017, 0.0
        %1020 = vadd.xlane.f32.xlu0 %v1019
        %v1021 = vpop.xlane.xlu0 %1020
        %v1022 = vsel %vm564, %v1018, 0.0
        %1023 = vadd.xlane.f32.xlu0 %v1022
        %v1024 = vpop.xlane.xlu0 %1023
        %v1025 = vadd.f32 %v1015, %v1021
        %v1026 = vadd.f32 %v1016, %v1024
        %1027 = vrot.lane.b32.xlu0 %v515, 72
        %v1028 = vpop.permute.xlu0 %1027
        %v1031 = vsel %vm564, %v1014, 0
        %1033 = vmatprep.subr.bf16.mxu0 0
        %1034 = vmatpush1.bf16.msra.mxu0 %v1028
        %1035 = vmatprep.subr.bf16.mxu0 0
        %1036 = vmatpush1.bf16.msra.mxu0 0
        %1037 = vmatprep.subr.bf16.mxu0 0
        %1038 = vmatpush1.bf16.msra.mxu0 0
        %1039 = vmatprep.subr.bf16.mxu0 0
        %1040 = vmatpush1.bf16.msra.mxu0 0
        %1041 = vmatprep.subr.bf16.mxu0 0
        %1042 = vmatpush1.bf16.msra.mxu0 0
        %1043 = vmatprep.subr.bf16.mxu0 0
        %1044 = vmatpush1.bf16.msra.mxu0 0
        %1045 = vmatprep.subr.bf16.mxu0 0
        %1046 = vmatpush1.bf16.msra.mxu0 0
        %1047 = vmatprep.subr.bf16.mxu0 0
        %1048 = vmatpush1.bf16.msra.mxu0 0
        %1049 = vmatprep.subr.bf16.mxu0 0
        %1050 = vmatpush1.bf16.msra.mxu0 0
        %1051 = vmatprep.subr.bf16.mxu0 0
        %1052 = vmatpush1.bf16.msra.mxu0 0
        %1053 = vmatprep.subr.bf16.mxu0 0
        %1054 = vmatpush1.bf16.msra.mxu0 0
        %1055 = vmatprep.subr.bf16.mxu0 0
        %1056 = vmatpush1.bf16.msra.mxu0 0
        %1057 = vmatprep.subr.bf16.mxu0 0
        %1058 = vmatpush1.bf16.msra.mxu0 0
        %1059 = vmatprep.subr.bf16.mxu0 0
        %1060 = vmatpush1.bf16.msra.mxu0 0
        %1061 = vmatprep.subr.bf16.mxu0 0
        %1062 = vmatpush1.bf16.msra.mxu0 0
        %1063 = vmatprep.subr.bf16.mxu0 0
        %1064 = vmatpush1.bf16.msra.mxu0 0
        %1065 = vmatprep.mubr.bf16.mxu0 0
        %1066 = vmatmul.mubr.bf16.gmra.mrb[0].mxu0 %v1031
        %v1067 = vpop.f32.mrb[0].mxu0
        %v1068 = vadd.f32 0.0, %v1067
        %v1069 = vpop.f32.mrb[0].mxu0
        %v1070 = vpop.f32.mrb[0].mxu0
        %v1071 = vadd.f32 0.0, %v1070
        %v1072 = vpop.f32.mrb[0].mxu0
        %1073 = vdwg.mxu0
        %1076 = vrot.lane.b32.xlu0 %v788, 8
        %v1077 = vpop.permute.xlu0 %1076
        %1078 = vrot.lane.b32.xlu0 %v791, 8
        %v1079 = vpop.permute.xlu0 %1078
        %1084 = vrot.lane.b32.xlu0 %v928, 16
        %v1085 = vpop.permute.xlu0 %1084
        %1086 = vrot.lane.b32.xlu0 %v931, 16
        %v1087 = vpop.permute.xlu0 %1086
        %1092 = vrot.lane.b32.xlu0 %v1068, 24
        %v1093 = vpop.permute.xlu0 %1092
        %1094 = vrot.lane.b32.xlu0 %v1071, 24
        %v1095 = vpop.permute.xlu0 %1094
        %v1098 = vsel %vm516, %v648, %v1077
        %v1099 = vsel %vm516, %v651, %v1079
        %v1100 = vsel %vm564, %v1098, %v1085
        %v1101 = vsel %vm564, %v1099, %v1087
        %vm1102 = vcmask 195584
        %v1103 = vsel %vm1102, %v1100, %v1093
        %v1104 = vsel %vm1102, %v1101, %v1095
        %1106 = vset.pattern.permute.xlu0 0
        %1107 = vperm.xlu0 %1106, %v576
        %v1108 = vpop.permute.xlu0 %1107
        %1111 = vset.pattern.permute.xlu0 0
        %1112 = vperm.xlu0 %1111, %v578
        %v1113 = vpop.permute.xlu0 %1112
        %1116 = vset.pattern.permute.xlu0 1
        %1117 = vperm.xlu0 %1116, %v716
        %v1118 = vpop.permute.xlu0 %1117
        %1121 = vset.pattern.permute.xlu0 1
        %1122 = vperm.xlu0 %1121, %v718
        %v1123 = vpop.permute.xlu0 %1122
        %1126 = vset.pattern.permute.xlu0 2
        %1127 = vperm.xlu0 %1126, %v856
        %v1128 = vpop.permute.xlu0 %1127
        %1131 = vset.pattern.permute.xlu0 2
        %1132 = vperm.xlu0 %1131, %v858
        %v1133 = vpop.permute.xlu0 %1132
        %1136 = vset.pattern.permute.xlu0 3
        %1137 = vperm.xlu0 %1136, %v996
        %v1138 = vpop.permute.xlu0 %1137
        %1141 = vset.pattern.permute.xlu0 3
        %1142 = vperm.xlu0 %1141, %v998
        %v1143 = vpop.permute.xlu0 %1142
        %v1145 = vsel %vm516, %v1108, %v1118
        %v1146 = vsel %vm516, %v1113, %v1123
        %v1147 = vsel %vm564, %v1145, %v1128
        %v1148 = vsel %vm564, %v1146, %v1133
        %v1149 = vsel %vm1102, %v1147, %v1138
        %v1150 = vsel %vm1102, %v1148, %v1143
        %v1151 = vld [vmem:[#allocation2] sm:$0xff]
        %v1152 = vld [vmem:[#allocation2 + $0x8] sm:$0xff]
        %v1153 = vmul.f32 %v1149, %v1151
        %v1154 = vmul.f32 %v1150, %v1152
        %v1155 = vadd.f32 %v1153, %v1103
        %v1156 = vadd.f32 %v1154, %v1104
        %vm1157 = vcmask 261120
        %1158 = vst.msk [vmem:[#allocation2] sm:$0xff] %vm1157, %v1155
        %1159 = vst.msk [vmem:[#allocation2 + $0x8] sm:$0xff] %vm1157, %v1156
        %vm1160 = vcmask 7168
        %v1161 = vsel %vm1160, %v571, %v711
        %v1162 = vsel %vm1160, %v572, %v712
        %vm1163 = vcmask 15360
        %v1164 = vsel %vm1163, %v1161, %v851
        %v1165 = vsel %vm1163, %v1162, %v852
        %vm1166 = vcmask 23552
        %v1167 = vsel %vm1166, %v1164, %v991
        %v1168 = vsel %vm1166, %v1165, %v992
        %vm1169 = vcmask 31744
        %1170 = vst.msk [vmem:[#allocation3] sm:$0xff] %vm1169, %v1167
        %1171 = vst.msk [vmem:[#allocation3 + $0x8] sm:$0xff] %vm1169, %v1168
        %v1172 = vsel %vm1160, %v605, %v745
        %v1173 = vsel %vm1160, %v606, %v746
        %v1174 = vsel %vm1163, %v1172, %v885
        %v1175 = vsel %vm1163, %v1173, %v886
        %v1176 = vsel %vm1166, %v1174, %v1025
        %v1177 = vsel %vm1166, %v1175, %v1026
        %1178 = vst.msk [vmem:[#allocation4] sm:$0xff] %vm1169, %v1176
        %1179 = vst.msk [vmem:[#allocation4 + $0x8] sm:$0xff] %vm1169, %v1177
        // Predicated region
        $region73: #{tpu_custom_call.1} parent=51 // pred_check
          %p1180 = pneg %p479
        $region74: #{tpu_custom_call.1} parent=51 // pred_check_branch
          %1182 = sbr.rel (%p1180) target = $region76
        $region75: #{tpu_custom_call.1} parent=51 // pred_region
          %v1183 = vld [vmem:[#allocation4] sm:$0xff]
          %v1184 = vld [vmem:[#allocation4 + $0x8] sm:$0xff]
          %v1185 = vrcp.pop %v1183
          %v1186 = vrcp.pop %v1184
          %1188 = vset.pattern.permute.xlu0 0
          %1189 = vperm.xlu0 %1188, %v1185
          %v1190 = vpop.permute.xlu0 %1189
          %1193 = vset.pattern.permute.xlu0 0
          %1194 = vperm.xlu0 %1193, %v1186
          %v1195 = vpop.permute.xlu0 %1194
          %1197 = vset.pattern.permute.xlu0 1
          %1198 = vperm.xlu0 %1197, %v1185
          %v1199 = vpop.permute.xlu0 %1198
          %1201 = vset.pattern.permute.xlu0 1
          %1202 = vperm.xlu0 %1201, %v1186
          %v1203 = vpop.permute.xlu0 %1202
          %1205 = vset.pattern.permute.xlu0 2
          %1206 = vperm.xlu0 %1205, %v1185
          %v1207 = vpop.permute.xlu0 %1206
          %1209 = vset.pattern.permute.xlu0 2
          %1210 = vperm.xlu0 %1209, %v1186
          %v1211 = vpop.permute.xlu0 %1210
          %1213 = vset.pattern.permute.xlu0 3
          %1214 = vperm.xlu0 %1213, %v1185
          %v1215 = vpop.permute.xlu0 %1214
          %1217 = vset.pattern.permute.xlu0 3
          %1218 = vperm.xlu0 %1217, %v1186
          %v1219 = vpop.permute.xlu0 %1218
          %v1221 = vsel %vm516, %v1190, %v1199
          %v1222 = vsel %vm516, %v1195, %v1203
          %v1223 = vsel %vm564, %v1221, %v1207
          %v1224 = vsel %vm564, %v1222, %v1211
          %v1225 = vsel %vm1102, %v1223, %v1215
          %v1226 = vsel %vm1102, %v1224, %v1219
          %v1227 = vld [vmem:[%s415] sm:$0xf]
          %v1228 = vld [vmem:[%s415 + $0x4] sm:$0xf]
          %v1229 = vld [vmem:[#allocation11] sm:$0xf]
          %v1230 = vld [vmem:[#allocation11 + $0x4] sm:$0xf]
          %v1231 = vld [vmem:[#allocation11 + $0x8] sm:$0xf]
          %v1232 = vld [vmem:[#allocation11 + $0xc] sm:$0xf]
          %v1233 = vld [vmem:[%s5] sm:$0x1]
          %v1235 = vlaneseq
          %v1236 = vshrl.u32 %v1235, 7
          %v1237 = vsub.s32 0, %v1236
          %v1238 = vrot.slane %v1233, %v1237
          %v1242 = vunpack.c.l.b16 %v1227
          %v1243 = vunpack.c.l.b16 %v1228
          %v1244 = vpack.c.b16 %v1243, %v1242
          %v1249 = vunpack.c.l.b16 %v1229
          %v1250 = vunpack.c.l.b16 %v1230
          %v1251 = vunpack.c.l.b16 %v1231
          %v1252 = vunpack.c.l.b16 %v1232
          %v1253 = vpack.c.b16 %v1250, %v1249
          %v1254 = vpack.c.b16 %v1252, %v1251
          %v1258 = vsel %vm1157, %v1244, 0
          %1260 = vmatprep.subr.bf16.mxu0 0
          %1261 = vmatpush1.bf16.msra.mxu0 %v1253
          %1262 = vmatprep.subr.bf16.mxu0 0
          %1263 = vmatpush1.bf16.msra.mxu0 %v1254
          %1264 = vmatprep.subr.bf16.mxu0 0
          %1265 = vmatpush1.bf16.msra.mxu0 0
          %1266 = vmatprep.subr.bf16.mxu0 0
          %1267 = vmatpush1.bf16.msra.mxu0 0
          %1268 = vmatprep.subr.bf16.mxu0 0
          %1269 = vmatpush1.bf16.msra.mxu0 0
          %1270 = vmatprep.subr.bf16.mxu0 0
          %1271 = vmatpush1.bf16.msra.mxu0 0
          %1272 = vmatprep.subr.bf16.mxu0 0
          %1273 = vmatpush1.bf16.msra.mxu0 0
          %1274 = vmatprep.subr.bf16.mxu0 0
          %1275 = vmatpush1.bf16.msra.mxu0 0
          %1276 = vmatprep.subr.bf16.mxu0 0
          %1277 = vmatpush1.bf16.msra.mxu0 0
          %1278 = vmatprep.subr.bf16.mxu0 0
          %1279 = vmatpush1.bf16.msra.mxu0 0
          %1280 = vmatprep.subr.bf16.mxu0 0
          %1281 = vmatpush1.bf16.msra.mxu0 0
          %1282 = vmatprep.subr.bf16.mxu0 0
          %1283 = vmatpush1.bf16.msra.mxu0 0
          %1284 = vmatprep.subr.bf16.mxu0 0
          %1285 = vmatpush1.bf16.msra.mxu0 0
          %1286 = vmatprep.subr.bf16.mxu0 0
          %1287 = vmatpush1.bf16.msra.mxu0 0
          %1288 = vmatprep.subr.bf16.mxu0 0
          %1289 = vmatpush1.bf16.msra.mxu0 0
          %1290 = vmatprep.subr.bf16.mxu0 0
          %1291 = vmatpush1.bf16.msra.mxu0 0
          %1292 = vmatprep.mubr.bf16.mxu0 0
          %1293 = vmatmul.mubr.bf16.gmra.mrb[0].mxu0 %v1258
          %v1294 = vpop.f32.mrb[0].mxu0
          %v1295 = vadd.f32 %v1238, %v1294
          %v1296 = vpop.f32.mrb[0].mxu0
          %v1297 = vpop.f32.mrb[0].mxu0
          %v1298 = vadd.f32 %v1238, %v1297
          %v1299 = vpop.f32.mrb[0].mxu0
          %1300 = vdwg.mxu0
          %v1301 = vxor.u32 %v1295, 2147483648
          %v1302 = vxor.u32 %v1298, 2147483648
          %v1303 = vmul.f32 %v1301, 1.442695
          %v1304 = vpow.pop %v1303
          %v1305 = vmul.f32 %v1302, 1.442695
          %v1306 = vpow.pop %v1305
          %v1307 = vadd.f32 %v1304, 1.0
          %v1308 = vadd.f32 %v1306, 1.0
          %v1309 = vrcp.pop %v1307
          %v1310 = vmul.f32 1.0, %v1309
          %v1311 = vrcp.pop %v1308
          %v1312 = vmul.f32 1.0, %v1311
          %v1313 = vld [vmem:[#allocation2] sm:$0xff]
          %v1314 = vld [vmem:[#allocation2 + $0x8] sm:$0xff]
          %v1315 = vmul.f32 %v1313, %v1225
          %v1316 = vmul.f32 %v1314, %v1226
          %v1317 = vmul.f32 %v1315, %v1310
          %v1318 = vmul.f32 %v1316, %v1312
          %v1319 = vpack.c.bf16 %v1318, %v1317
          %v1320 = vld [vmem:[%s6] sm:$0xf]
          %v1321 = vld [vmem:[%s6 + $0x4] sm:$0xf]
          %v1322 = vld [vmem:[%s6 + $0x8] sm:$0xf]
          %v1323 = vld [vmem:[%s6 + $0xc] sm:$0xf]
          %v1324 = vld [vmem:[%s7] sm:$0x1]
          %v1326 = vlaneseq
          %v1327 = vshrl.u32 %v1326, 7
          %v1328 = vsub.s32 0, %v1327
          %v1329 = vrot.slane %v1324, %v1328
          %v1335 = vunpack.c.l.b16 %v1320
          %v1336 = vunpack.c.l.b16 %v1321
          %v1337 = vunpack.c.l.b16 %v1322
          %v1338 = vunpack.c.l.b16 %v1323
          %v1339 = vpack.c.b16 %v1336, %v1335
          %v1340 = vpack.c.b16 %v1338, %v1337
          %v1344 = vsel %vm1157, %v1319, 0
          %1346 = vmatprep.subr.bf16.mxu0 0
          %1347 = vmatpush1.bf16.msra.mxu0 %v1339
          %1348 = vmatprep.subr.bf16.mxu0 0
          %1349 = vmatpush1.bf16.msra.mxu0 %v1340
          %1350 = vmatprep.subr.bf16.mxu0 0
          %1351 = vmatpush1.bf16.msra.mxu0 0
          %1352 = vmatprep.subr.bf16.mxu0 0
          %1353 = vmatpush1.bf16.msra.mxu0 0
          %1354 = vmatprep.subr.bf16.mxu0 0
          %1355 = vmatpush1.bf16.msra.mxu0 0
          %1356 = vmatprep.subr.bf16.mxu0 0
          %1357 = vmatpush1.bf16.msra.mxu0 0
          %1358 = vmatprep.subr.bf16.mxu0 0
          %1359 = vmatpush1.bf16.msra.mxu0 0
          %1360 = vmatprep.subr.bf16.mxu0 0
          %1361 = vmatpush1.bf16.msra.mxu0 0
          %1362 = vmatprep.subr.bf16.mxu0 0
          %1363 = vmatpush1.bf16.msra.mxu0 0
          %1364 = vmatprep.subr.bf16.mxu0 0
          %1365 = vmatpush1.bf16.msra.mxu0 0
          %1366 = vmatprep.subr.bf16.mxu0 0
          %1367 = vmatpush1.bf16.msra.mxu0 0
          %1368 = vmatprep.subr.bf16.mxu0 0
          %1369 = vmatpush1.bf16.msra.mxu0 0
          %1370 = vmatprep.subr.bf16.mxu0 0
          %1371 = vmatpush1.bf16.msra.mxu0 0
          %1372 = vmatprep.subr.bf16.mxu0 0
          %1373 = vmatpush1.bf16.msra.mxu0 0
          %1374 = vmatprep.subr.bf16.mxu0 0
          %1375 = vmatpush1.bf16.msra.mxu0 0
          %1376 = vmatprep.subr.bf16.mxu0 0
          %1377 = vmatpush1.bf16.msra.mxu0 0
          %1378 = vmatprep.mubr.bf16.mxu0 0
          %1379 = vmatmul.mubr.bf16.gmra.mrb[0].mxu0 %v1344
          %v1380 = vpop.f32.mrb[0].mxu0
          %v1381 = vadd.f32 %v1329, %v1380
          %v1382 = vpop.f32.mrb[0].mxu0
          %v1383 = vpop.f32.mrb[0].mxu0
          %v1384 = vadd.f32 %v1329, %v1383
          %v1385 = vpop.f32.mrb[0].mxu0
          %1386 = vdwg.mxu0
          %1387 = vst.msk [vmem:[%s467] sm:$0xff] %vm1157, %v1381
          %1388 = vst.msk [vmem:[%s467 + $0x8] sm:$0xff] %vm1157, %v1384
        $region76: #{tpu_custom_call.1} parent=51 // pred_fallthru
          _
        %s1389 = sand.u32 %s254, 1
        %s1390 = scalar_lea.sflag [#allocation7], %s1389
        %s1391 = sand.u32 %s254, 1
        %s1392 = smul.addr %s1391, 16
        %s1393 = scalar_lea.vmem [#allocation13], %s1392
        // Predicated region
        $region77: #{tpu_custom_call.1} parent=51 // pred_check
          %p1394 = pneg %p264
        $region78: #{tpu_custom_call.1} parent=51 // pred_check_branch
          %1396 = sbr.rel (%p1394) target = $region80
        $region79: #{tpu_custom_call.1} parent=51 // pred_region
          %s1397 = smul.u32 2, %s35
          %s1399 = ssub.s32 256, 256
          %1400 = vsyncadd %s1390, %s1399
          %s1401 = smul.addr %s34, 2
          %s1402 = sadd.s32 %s1397, %s1401
          %s1403 = smul.addr %s1402, 128
          %s1404 = scalar_lea.hbm %s8, %s1403
          %s1405 = sshll.u32 %s1393, 4
          %s1406 = int_to_ptr.vmem [resolvable:$true] %s1405
          %1411 = dma.vmem_to_hbm [thread:$0]  %s1406, 256, %s1404, %s1390, 128, 128, 8
        $region80: #{tpu_custom_call.1} parent=51 // pred_fallthru
          _
      $region52: #{tpu_custom_call.1} parent=5 // pred_fallthru
        _
      %p1412 = scmp.le.s32.totalorder 2, %s24
      // Predicated region
      $region81: #{tpu_custom_call.1} parent=5 // pred_check
        %p1413 = pneg %p1412
      $region82: #{tpu_custom_call.1} parent=5 // pred_check_branch
        %1415 = sbr.rel (%p1413) target = $region84
      $region83: #{tpu_custom_call.1} parent=5 // pred_region
        %s1416 = ssub.s32 %s24, 2
        // Predicated region
        $region85: #{tpu_custom_call.1} parent=83 // pred_check
          %p1417 = pneg %p270
        $region86: #{tpu_custom_call.1} parent=83 // pred_check_branch
          %1419 = sbr.rel (%p1417) target = $region88
        $region87: #{tpu_custom_call.1} parent=83 // pred_region
          %s1420 = sand.u32 %s255, 1
          %s1421 = scalar_lea.sflag [#allocation7], %s1420
          %s1422 = sand.u32 %s255, 1
          %s1423 = smul.addr %s1422, 16
          %s1424 = scalar_lea.vmem [#allocation13], %s1423
          %1425 = dma.done %s1421, 256
        $region88: #{tpu_custom_call.1} parent=83 // pred_fallthru
          _
      $region84: #{tpu_custom_call.1} parent=5 // pred_fallthru
        _
    $region6: #{tpu_custom_call.1} parent=1 // loop_footer
      %s28 = sadd.s32 1, %s24
    $region7: #{tpu_custom_call.1} parent=1 // loop_footer_branch
      %23 = sbr.rel target = $region3
    $region8: #{tpu_custom_call.1} parent=1 // loop_exit
      _
    %1426 = vsyncpa [#allocation6], 1
    %s1427 = scalar_lea.sflag [#allocation6], 1
    %1428 = vsyncpa %s1427, 1
    %1429 = vsyncpa [#allocation9], 1
    %s1430 = scalar_lea.sflag [#allocation9], 1
    %1431 = vsyncpa %s1430, 1
    %1432 = vsyncpa [#allocation12], 1
    %1433 = vsyncpa [#allocation7], 1
    %s1434 = scalar_lea.sflag [#allocation7], 1
    %1435 = vsyncpa %s1434, 1

</llo_original>
